<compile_context>
chip_gen: v6e
topology: v6e:2x2x1
jax: 0.10.0
libtpu: 0.0.40
codegen_flags: <defaults>
</compile_context>

<pallas_src>
import functools

import jax
import jax.numpy as jnp
from jax import lax
from jax.experimental import pallas as pl
from jax.experimental.pallas import tpu as pltpu

F32 = jnp.float32


# --------------------------------------------------------------------------
# Parameter initialization (mirrors RENRG.__init__ / NetworkedRENs.__init__)
# --------------------------------------------------------------------------
def init_params(key, N, n, m, n_xi, l):
    rens = []
    for _ in range(N):
        key, *ks = jax.random.split(key, 10)
        rp = {
            "X": jax.random.normal(ks[0], (2 * n_xi + l, 2 * n_xi + l), F32),
            "Y": jax.random.normal(ks[1], (n_xi, n_xi), F32),
            "B2": jax.random.normal(ks[2], (n_xi, n), F32),
            "C2": jax.random.normal(ks[3], (m, n_xi), F32),
            "D21": jax.random.normal(ks[4], (m, l), F32),
            "D12": jax.random.normal(ks[5], (l, n), F32),
        }
        if m >= n:
            rp["Z3"] = jax.random.normal(ks[6], (m - n, n), F32)
            rp["X3"] = jax.random.normal(ks[7], (n, n), F32)
            rp["Y3"] = jax.random.normal(ks[8], (n, n), F32)
        else:
            rp["Z3"] = jax.random.normal(ks[6], (n - m, m), F32)
            rp["X3"] = jax.random.normal(ks[7], (m, m), F32)
            rp["Y3"] = jax.random.normal(ks[8], (m, m), F32)
        # bxi / bv / bu exist in the torch module but are unused in forward().
        rens.append(rp)
    key, ky = jax.random.split(key)
    params = {"rens": rens, "y": jax.random.normal(ky, (N,), F32)}
    return params, key


# --------------------------------------------------------------------------
# gamma-dependent derived matrices of one RENRG (parameter-only preprocessing;
# vmappable over the N RENs)
# --------------------------------------------------------------------------
def derive_ren(rp, gamma, n, m, n_xi, l, epsilon=1e-3):
    nm = min(n, m)
    I_n = jnp.eye(n, dtype=F32)
    I_m = jnp.eye(m, dtype=F32)
    I_nm = jnp.eye(nm, dtype=F32)

    X3, Y3, Z3 = rp["X3"], rp["Y3"], rp["Z3"]
    M = X3.T @ X3 + Y3 - Y3.T + Z3.T @ Z3 + epsilon * I_nm
    IM_inv = jnp.linalg.inv(I_nm + M)                       # inv(I + M)
    if m >= n:
        N_mat = jnp.vstack([(I_nm - M) @ IM_inv, -2.0 * Z3 @ IM_inv])
    else:
        N_mat = jnp.hstack([IM_inv @ (I_nm - M), -2.0 * IM_inv @ Z3.T])
    D22 = gamma * N_mat                                     # (m, n)

    R = gamma * I_n
    Q = -(1.0 / gamma) * I_m
    R_cap = R - (1.0 / gamma) * (D22.T @ D22)

    C2, D21, D12, B2, X, Y = rp["C2"], rp["D21"], rp["D12"], rp["B2"], rp["X"], rp["Y"]
    C2_cap = D22.T @ Q @ C2
    D21_cap = D22.T @ Q @ D21 - D12.T
    vec_R = jnp.concatenate([C2_cap.T, D21_cap.T, B2], axis=0)        # (2nxi+l, n)
    vec_Q = jnp.concatenate([C2.T, D21.T, jnp.zeros((n_xi, m), F32)], axis=0)

    H = (X.T @ X
         + epsilon * jnp.eye(2 * n_xi + l, dtype=F32)
         + vec_R @ jnp.linalg.inv(R_cap) @ vec_R.T
         - vec_Q @ Q @ vec_Q.T)

    H11 = H[:n_xi, :n_xi]
    H21 = H[n_xi:n_xi + l, :n_xi]
    H22 = H[n_xi:n_xi + l, n_xi:n_xi + l]
    H31 = H[n_xi + l:, :n_xi]
    H32 = H[n_xi + l:, n_xi:n_xi + l]
    H33 = H[n_xi + l:, n_xi + l:]

    Fm = H31
    B1 = H32
    E = 0.5 * (H11 + H33 + Y - Y.T)
    Lam = jnp.diag(H22)
    D11 = -jnp.tril(H22, k=-1)
    C1 = -H21
    Einv = jnp.linalg.inv(E)
    return dict(C1=C1, D11=D11, D12=D12, Lam=Lam, C2=C2, D21=D21, D22=D22,
                F=Fm, B1=B1, B2=B2, Einv=Einv)


# --------------------------------------------------------------------------
# Pallas kernel: all N RENs in one shot, N batched along the sublane axis
# --------------------------------------------------------------------------
def _net_ren_kernel(ymd_ref, wu_ref, xi_ref, wv_ref, d11T_ref, lam_ref,
                    wyx_ref, out_ref):
    def bmv(x, wt):
        # Batched mat-vec  out[b, r] = sum_k wt[b, r, k] * x[b, k].
        # Exact-f32 broadcast-multiply + lane reduce (VPU/XLU): at these
        # degenerate sizes this replaces the old Precision.HIGHEST multi-pass
        # MXU emulation with zero accuracy loss.
        return jnp.sum(x[:, None, :] * wt, axis=-1)

    ymd = ymd_ref[...]                       # (N, My+Md)
    xi = xi_ref[...]                         # (N, n_xi)
    d11T = d11T_ref[...]                     # (N, l, l) == per-REN D11^T
    inv_lam = 1.0 / lam_ref[...]             # (N, l); hoisted out of the loop,
                                             # exact reciprocal (Lam may be small)

    # 1) input mixing  w_j = Muy_j @ ym + Mud_j @ d  for all RENs at once
    w = bmv(ymd, wu_ref[...])                # (N, n)

    # 2) eps-independent part of v for every channel:  [xi | w] @ [C1 | D12]^T
    vcur = bmv(jnp.concatenate([xi, w], axis=-1), wv_ref[...])      # (N, l)

    # 3) sequential epsilon recursion, O(l^2): one axpy per finalized channel.
    nb, ld = vcur.shape
    eps = jnp.zeros((nb, ld), F32)
    col = lax.broadcasted_iota(jnp.int32, (nb, ld), 1)
    # l is small (8) -> static unroll; for larger l switch to
    # lax.fori_loop(..., unroll=k) to bound code size / vreg pressure.
    for i in range(ld):
        e_i = jnp.maximum(vcur[:, i:i + 1] * inv_lam[:, i:i + 1], 0.0)   # (N, 1)
        eps = jnp.where(col == i, e_i, eps)
        # propagate eps_i to still-open channels j > i (D11 strictly lower-tri)
        vcur = vcur + e_i * d11T[:, i, :]

    # 4) [y | xi_next] in one batched contraction (E^-1 pre-folded into Wyx)
    z = jnp.concatenate([xi, eps, w], axis=-1)                      # (N, n_xi+l+n)
    out_ref[...] = bmv(z, wyx_ref[...])                             # (N, m+n_xi)


# --------------------------------------------------------------------------
# Wrapper: vmapped derivation, weight packing, single pallas_call
# --------------------------------------------------------------------------
def networked_rens_forward(params, Muy, Mud, ym, d, xim, n, m, n_xi, l):
    N = len(params["rens"])
    gammas = 1.0 / (jnp.sqrt(jnp.asarray(2.0, F32)) + jnp.abs(params["y"]))   # (N,)

    # ---- one-time, parameter-only preprocessing (batched over RENs) --------
    stacked = jax.tree_util.tree_map(lambda *xs: jnp.stack(xs), *params["rens"])
    der = jax.vmap(lambda rp, g: derive_ren(rp, g, n, m, n_xi, l))(stacked, gammas)

    # Fold E^-1 into F / B1 / B2 so the kernel needs no separate Einv stage.
    # (HIGHEST precision here is one-time preprocessing, not the hot path.)
    hi = functools.partial(jnp.matmul, precision=lax.Precision.HIGHEST)
    Fh = hi(der["Einv"], der["F"])           # (N, n_xi, n_xi)
    B1h = hi(der["Einv"], der["B1"])         # (N, n_xi, l)
    B2h = hi(der["Einv"], der["B2"])         # (N, n_xi, n)

    # Packed per-REN weights, (out_dim, in_dim) orientation.
    Wv = jnp.concatenate([der["C1"], der["D12"]], axis=2)              # (N, l, n_xi+n)
    Wy = jnp.concatenate([der["C2"], der["D21"], der["D22"]], axis=2)  # (N, m, n_xi+l+n)
    Wx = jnp.concatenate([Fh, B1h, B2h], axis=2)                       # (N, n_xi, n_xi+l+n)
    Wyx = jnp.concatenate([Wy, Wx], axis=1)                            # (N, m+n_xi, n_xi+l+n)
    D11T = jnp.swapaxes(der["D11"], 1, 2)                              # (N, l, l)
    Lam = der["Lam"]                                                   # (N, l)

    My, Md = ym.shape[0], d.shape[0]
    Wu = jnp.concatenate([Muy.reshape(N, n, My).astype(F32),
                          Mud.reshape(N, n, Md).astype(F32)], axis=2)  # (N, n, My+Md)
    ymd = jnp.broadcast_to(jnp.concatenate([ym, d]).astype(F32)[None, :],
                           (N, My + Md))
    xi0 = xim.reshape(N, n_xi).astype(F32)

    vspec = pl.BlockSpec(memory_space=pltpu.MemorySpace.VMEM)   # whole array in VMEM
    out = pl.pallas_call(
        _net_ren_kernel,
        out_shape=jax.ShapeDtypeStruct((N, m + n_xi), F32),
        in_specs=[vspec] * 7,
        out_specs=vspec,
        # Total working set is a few KiB: fits default scoped VMEM on
        # v5e/v6e (128 MiB phys) and v7x (64 MiB phys) with huge headroom.
    )(ymd, Wu, xi0, Wv, D11T, Lam, Wyx)

    y = out[:, :m].reshape(N * m)
    xi_next = out[:, m:].reshape(N * n_xi)
    return y, xi_next, [gammas[j] for j in range(N)]


# --------------------------------------------------------------------------
# Pure-JAX reference (mirrors the PyTorch forward semantics)
# --------------------------------------------------------------------------
def networked_rens_ref(params, Muy, Mud, ym, d, xim, n, m, n_xi, l):
    N = len(params["rens"])
    gammas = 1.0 / (jnp.sqrt(jnp.asarray(2.0, F32)) + jnp.abs(params["y"]))
    mv = functools.partial(jnp.matmul, precision=lax.Precision.HIGHEST)
    u = mv(Muy, ym) + mv(Mud, d)
    ys, xis = [], []
    for j in range(N):
        der = derive_ren(params["rens"][j], gammas[j], n, m, n_xi, l)
        w = u[j * n:(j + 1) * n]
        xi = xim[j * n_xi:(j + 1) * n_xi]
        eps = jnp.zeros((l,), F32)
        for i in range(l):
            v = mv(der["C1"][i], xi) + mv(der["D11"][i], eps) + mv(der["D12"][i], w)
            eps = eps.at[i].set(jnp.maximum(v / der["Lam"][i], 0.0))
        y = mv(der["C2"], xi) + mv(der["D21"], eps) + mv(der["D22"], w)
        exi = mv(der["F"], xi) + mv(der["B1"], eps) + mv(der["B2"], w)
        xin = mv(der["Einv"], exi)
        ys.append(y)
        xis.append(xin)
    return jnp.concatenate(ys), jnp.concatenate(xis), gammas


# --------------------------------------------------------------------------
if __name__ == "__main__":
    # N RENs with n inputs, m outputs, n_xi states and l nonlinear channels.
    N = 2
    n, m, n_xi, l = 4, 6, 8, 8

    key = jax.random.PRNGKey(0)
    params, key = init_params(key, N, n, m, n_xi, l)

    sum_n, sum_m, sum_xi = N * n, N * m, N * n_xi
    My = sum_m        # ym collects the measured outputs of all RENs
    Md = 4            # external disturbance dimension

    k1, k2, k3, k4, k5 = jax.random.split(key, 5)
    Muy = jax.random.normal(k1, (sum_n, My), F32)
    Mud = jax.random.normal(k2, (sum_n, Md), F32)
    ym = jax.random.normal(k3, (My,), F32)
    d = jax.random.normal(k4, (Md,), F32)
    xim = jax.random.normal(k5, (sum_xi,), F32)

    fwd = jax.jit(functools.partial(networked_rens_forward,
                                    n=n, m=m, n_xi=n_xi, l=l))
    y_out, xi_out, gamma_list = fwd(params, Muy, Mud, ym, d, xim)
    jax.block_until_ready((y_out, xi_out))

    y_ref, xi_ref, _ = networked_rens_ref(params, Muy, Mud, ym, d, xim, n, m, n_xi, l)
    err_y = float(jnp.max(jnp.abs(y_out - y_ref)) / (jnp.max(jnp.abs(y_ref)) + 1e-6))
    err_xi = float(jnp.max(jnp.abs(xi_out - xi_ref)) / (jnp.max(jnp.abs(xi_ref)) + 1e-6))
    assert err_y < 1e-2 and err_xi < 1e-2, (err_y, err_xi)

    print("KERNEL_OK")
</pallas_src>

<mosaic_0001>
module attributes {stable_mosaic.version = 11 : i64} {
  func.func @_net_ren_kernel(%arg0: memref<2x16xf32, #tpu.memory_space<vmem>>, %arg1: memref<2x4x16xf32, #tpu.memory_space<vmem>>, %arg2: memref<2x8xf32, #tpu.memory_space<vmem>>, %arg3: memref<2x8x12xf32, #tpu.memory_space<vmem>>, %arg4: memref<2x8x8xf32, #tpu.memory_space<vmem>>, %arg5: memref<2x8xf32, #tpu.memory_space<vmem>>, %arg6: memref<2x14x20xf32, #tpu.memory_space<vmem>>, %arg7: memref<2x14xf32, #tpu.memory_space<vmem>>) attributes {dimension_semantics = [], scalar_prefetch = 0 : i64, scratch_operands = 0 : i64, tpu.core_type = #tpu.core_type<tc>} {
    %c0 = arith.constant 0 : index
    %c0_0 = arith.constant 0 : index
    %0 = vector.load %arg0[%c0, %c0_0] : memref<2x16xf32, #tpu.memory_space<vmem>>, vector<2x16xf32>
    %c0_1 = arith.constant 0 : index
    %c0_2 = arith.constant 0 : index
    %1 = vector.load %arg2[%c0_1, %c0_2] : memref<2x8xf32, #tpu.memory_space<vmem>>, vector<2x8xf32>
    %c0_3 = arith.constant 0 : index
    %c0_4 = arith.constant 0 : index
    %c0_5 = arith.constant 0 : index
    %2 = vector.load %arg4[%c0_3, %c0_4, %c0_5] : memref<2x8x8xf32, #tpu.memory_space<vmem>>, vector<2x8x8xf32>
    %c0_6 = arith.constant 0 : index
    %c0_7 = arith.constant 0 : index
    %3 = vector.load %arg5[%c0_6, %c0_7] : memref<2x8xf32, #tpu.memory_space<vmem>>, vector<2x8xf32>
    %cst = arith.constant 1.000000e+00 : f32
    %4 = vector.broadcast %cst : f32 to vector<2x8xf32>
    %5 = arith.divf %4, %3 : vector<2x8xf32>
    %c0_8 = arith.constant 0 : index
    %c0_9 = arith.constant 0 : index
    %c0_10 = arith.constant 0 : index
    %6 = vector.load %arg1[%c0_8, %c0_9, %c0_10] : memref<2x4x16xf32, #tpu.memory_space<vmem>>, vector<2x4x16xf32>
    %7 = vector.shape_cast %0 : vector<2x16xf32> to vector<2x1x16xf32>
    %8 = vector.broadcast %7 : vector<2x1x16xf32> to vector<2x4x16xf32>
    %9 = arith.mulf %8, %6 : vector<2x4x16xf32>
    %cst_11 = arith.constant dense<0.000000e+00> : vector<2x4xf32>
    %10 = vector.multi_reduction <add>, %9, %cst_11 [2] : vector<2x4x16xf32> to vector<2x4xf32>
    %11 = tpu.concatenate %1, %10 in 1 : vector<2x8xf32>, vector<2x4xf32> -> vector<2x12xf32>
    %c0_12 = arith.constant 0 : index
    %c0_13 = arith.constant 0 : index
    %c0_14 = arith.constant 0 : index
    %12 = vector.load %arg3[%c0_12, %c0_13, %c0_14] : memref<2x8x12xf32, #tpu.memory_space<vmem>>, vector<2x8x12xf32>
    %13 = vector.shape_cast %11 : vector<2x12xf32> to vector<2x1x12xf32>
    %14 = vector.broadcast %13 : vector<2x1x12xf32> to vector<2x8x12xf32>
    %15 = arith.mulf %14, %12 : vector<2x8x12xf32>
    %cst_15 = arith.constant dense<0.000000e+00> : vector<2x8xf32>
    %16 = vector.multi_reduction <add>, %15, %cst_15 [2] : vector<2x8x12xf32> to vector<2x8xf32>
    %cst_16 = arith.constant 0.000000e+00 : f32
    %17 = vector.broadcast %cst_16 : f32 to vector<2x8xf32>
    %18 = tpu.iota {dimensions = array<i32: 1>} : vector<2x8xi32>
    %19 = vector.extract_strided_slice %16 {offsets = [0, 0], sizes = [2, 1], strides = [1, 1]} : vector<2x8xf32> to vector<2x1xf32>
    %20 = vector.extract_strided_slice %5 {offsets = [0, 0], sizes = [2, 1], strides = [1, 1]} : vector<2x8xf32> to vector<2x1xf32>
    %21 = arith.mulf %19, %20 : vector<2x1xf32>
    %cst_17 = arith.constant 0.000000e+00 : f32
    %22 = vector.broadcast %cst_17 : f32 to vector<2x1xf32>
    %23 = arith.maximumf %21, %22 : vector<2x1xf32>
    %c0_i32 = arith.constant 0 : i32
    %24 = vector.broadcast %c0_i32 : i32 to vector<2x8xi32>
    %25 = arith.cmpi eq, %18, %24 : vector<2x8xi32>
    %26 = vector.shape_cast %23 : vector<2x1xf32> to vector<2x1xf32>
    %27 = vector.broadcast %26 : vector<2x1xf32> to vector<2x8xf32>
    %28 = arith.select %25, %27, %17 : vector<2x8xi1>, vector<2x8xf32>
    %29 = vector.extract_strided_slice %2 {offsets = [0, 0, 0], sizes = [2, 1, 8], strides = [1, 1, 1]} : vector<2x8x8xf32> to vector<2x1x8xf32>
    %30 = vector.shape_cast %29 : vector<2x1x8xf32> to vector<2x8xf32>
    %31 = vector.broadcast %23 : vector<2x1xf32> to vector<2x8xf32>
    %32 = arith.mulf %31, %30 : vector<2x8xf32>
    %33 = arith.addf %16, %32 : vector<2x8xf32>
    %34 = vector.extract_strided_slice %33 {offsets = [0, 1], sizes = [2, 1], strides = [1, 1]} : vector<2x8xf32> to vector<2x1xf32>
    %35 = vector.extract_strided_slice %5 {offsets = [0, 1], sizes = [2, 1], strides = [1, 1]} : vector<2x8xf32> to vector<2x1xf32>
    %36 = arith.mulf %34, %35 : vector<2x1xf32>
    %cst_18 = arith.constant 0.000000e+00 : f32
    %37 = vector.broadcast %cst_18 : f32 to vector<2x1xf32>
    %38 = arith.maximumf %36, %37 : vector<2x1xf32>
    %c1_i32 = arith.constant 1 : i32
    %39 = vector.broadcast %c1_i32 : i32 to vector<2x8xi32>
    %40 = arith.cmpi eq, %18, %39 : vector<2x8xi32>
    %41 = vector.shape_cast %38 : vector<2x1xf32> to vector<2x1xf32>
    %42 = vector.broadcast %41 : vector<2x1xf32> to vector<2x8xf32>
    %43 = arith.select %40, %42, %28 : vector<2x8xi1>, vector<2x8xf32>
    %44 = vector.extract_strided_slice %2 {offsets = [0, 1, 0], sizes = [2, 1, 8], strides = [1, 1, 1]} : vector<2x8x8xf32> to vector<2x1x8xf32>
    %45 = vector.shape_cast %44 : vector<2x1x8xf32> to vector<2x8xf32>
    %46 = vector.broadcast %38 : vector<2x1xf32> to vector<2x8xf32>
    %47 = arith.mulf %46, %45 : vector<2x8xf32>
    %48 = arith.addf %33, %47 : vector<2x8xf32>
    %49 = vector.extract_strided_slice %48 {offsets = [0, 2], sizes = [2, 1], strides = [1, 1]} : vector<2x8xf32> to vector<2x1xf32>
    %50 = vector.extract_strided_slice %5 {offsets = [0, 2], sizes = [2, 1], strides = [1, 1]} : vector<2x8xf32> to vector<2x1xf32>
    %51 = arith.mulf %49, %50 : vector<2x1xf32>
    %cst_19 = arith.constant 0.000000e+00 : f32
    %52 = vector.broadcast %cst_19 : f32 to vector<2x1xf32>
    %53 = arith.maximumf %51, %52 : vector<2x1xf32>
    %c2_i32 = arith.constant 2 : i32
    %54 = vector.broadcast %c2_i32 : i32 to vector<2x8xi32>
    %55 = arith.cmpi eq, %18, %54 : vector<2x8xi32>
    %56 = vector.shape_cast %53 : vector<2x1xf32> to vector<2x1xf32>
    %57 = vector.broadcast %56 : vector<2x1xf32> to vector<2x8xf32>
    %58 = arith.select %55, %57, %43 : vector<2x8xi1>, vector<2x8xf32>
    %59 = vector.extract_strided_slice %2 {offsets = [0, 2, 0], sizes = [2, 1, 8], strides = [1, 1, 1]} : vector<2x8x8xf32> to vector<2x1x8xf32>
    %60 = vector.shape_cast %59 : vector<2x1x8xf32> to vector<2x8xf32>
    %61 = vector.broadcast %53 : vector<2x1xf32> to vector<2x8xf32>
    %62 = arith.mulf %61, %60 : vector<2x8xf32>
    %63 = arith.addf %48, %62 : vector<2x8xf32>
    %64 = vector.extract_strided_slice %63 {offsets = [0, 3], sizes = [2, 1], strides = [1, 1]} : vector<2x8xf32> to vector<2x1xf32>
    %65 = vector.extract_strided_slice %5 {offsets = [0, 3], sizes = [2, 1], strides = [1, 1]} : vector<2x8xf32> to vector<2x1xf32>
    %66 = arith.mulf %64, %65 : vector<2x1xf32>
    %cst_20 = arith.constant 0.000000e+00 : f32
    %67 = vector.broadcast %cst_20 : f32 to vector<2x1xf32>
    %68 = arith.maximumf %66, %67 : vector<2x1xf32>
    %c3_i32 = arith.constant 3 : i32
    %69 = vector.broadcast %c3_i32 : i32 to vector<2x8xi32>
    %70 = arith.cmpi eq, %18, %69 : vector<2x8xi32>
    %71 = vector.shape_cast %68 : vector<2x1xf32> to vector<2x1xf32>
    %72 = vector.broadcast %71 : vector<2x1xf32> to vector<2x8xf32>
    %73 = arith.select %70, %72, %58 : vector<2x8xi1>, vector<2x8xf32>
    %74 = vector.extract_strided_slice %2 {offsets = [0, 3, 0], sizes = [2, 1, 8], strides = [1, 1, 1]} : vector<2x8x8xf32> to vector<2x1x8xf32>
    %75 = vector.shape_cast %74 : vector<2x1x8xf32> to vector<2x8xf32>
    %76 = vector.broadcast %68 : vector<2x1xf32> to vector<2x8xf32>
    %77 = arith.mulf %76, %75 : vector<2x8xf32>
    %78 = arith.addf %63, %77 : vector<2x8xf32>
    %79 = vector.extract_strided_slice %78 {offsets = [0, 4], sizes = [2, 1], strides = [1, 1]} : vector<2x8xf32> to vector<2x1xf32>
    %80 = vector.extract_strided_slice %5 {offsets = [0, 4], sizes = [2, 1], strides = [1, 1]} : vector<2x8xf32> to vector<2x1xf32>
    %81 = arith.mulf %79, %80 : vector<2x1xf32>
    %cst_21 = arith.constant 0.000000e+00 : f32
    %82 = vector.broadcast %cst_21 : f32 to vector<2x1xf32>
    %83 = arith.maximumf %81, %82 : vector<2x1xf32>
    %c4_i32 = arith.constant 4 : i32
    %84 = vector.broadcast %c4_i32 : i32 to vector<2x8xi32>
    %85 = arith.cmpi eq, %18, %84 : vector<2x8xi32>
    %86 = vector.shape_cast %83 : vector<2x1xf32> to vector<2x1xf32>
    %87 = vector.broadcast %86 : vector<2x1xf32> to vector<2x8xf32>
    %88 = arith.select %85, %87, %73 : vector<2x8xi1>, vector<2x8xf32>
    %89 = vector.extract_strided_slice %2 {offsets = [0, 4, 0], sizes = [2, 1, 8], strides = [1, 1, 1]} : vector<2x8x8xf32> to vector<2x1x8xf32>
    %90 = vector.shape_cast %89 : vector<2x1x8xf32> to vector<2x8xf32>
    %91 = vector.broadcast %83 : vector<2x1xf32> to vector<2x8xf32>
    %92 = arith.mulf %91, %90 : vector<2x8xf32>
    %93 = arith.addf %78, %92 : vector<2x8xf32>
    %94 = vector.extract_strided_slice %93 {offsets = [0, 5], sizes = [2, 1], strides = [1, 1]} : vector<2x8xf32> to vector<2x1xf32>
    %95 = vector.extract_strided_slice %5 {offsets = [0, 5], sizes = [2, 1], strides = [1, 1]} : vector<2x8xf32> to vector<2x1xf32>
    %96 = arith.mulf %94, %95 : vector<2x1xf32>
    %cst_22 = arith.constant 0.000000e+00 : f32
    %97 = vector.broadcast %cst_22 : f32 to vector<2x1xf32>
    %98 = arith.maximumf %96, %97 : vector<2x1xf32>
    %c5_i32 = arith.constant 5 : i32
    %99 = vector.broadcast %c5_i32 : i32 to vector<2x8xi32>
    %100 = arith.cmpi eq, %18, %99 : vector<2x8xi32>
    %101 = vector.shape_cast %98 : vector<2x1xf32> to vector<2x1xf32>
    %102 = vector.broadcast %101 : vector<2x1xf32> to vector<2x8xf32>
    %103 = arith.select %100, %102, %88 : vector<2x8xi1>, vector<2x8xf32>
    %104 = vector.extract_strided_slice %2 {offsets = [0, 5, 0], sizes = [2, 1, 8], strides = [1, 1, 1]} : vector<2x8x8xf32> to vector<2x1x8xf32>
    %105 = vector.shape_cast %104 : vector<2x1x8xf32> to vector<2x8xf32>
    %106 = vector.broadcast %98 : vector<2x1xf32> to vector<2x8xf32>
    %107 = arith.mulf %106, %105 : vector<2x8xf32>
    %108 = arith.addf %93, %107 : vector<2x8xf32>
    %109 = vector.extract_strided_slice %108 {offsets = [0, 6], sizes = [2, 1], strides = [1, 1]} : vector<2x8xf32> to vector<2x1xf32>
    %110 = vector.extract_strided_slice %5 {offsets = [0, 6], sizes = [2, 1], strides = [1, 1]} : vector<2x8xf32> to vector<2x1xf32>
    %111 = arith.mulf %109, %110 : vector<2x1xf32>
    %cst_23 = arith.constant 0.000000e+00 : f32
    %112 = vector.broadcast %cst_23 : f32 to vector<2x1xf32>
    %113 = arith.maximumf %111, %112 : vector<2x1xf32>
    %c6_i32 = arith.constant 6 : i32
    %114 = vector.broadcast %c6_i32 : i32 to vector<2x8xi32>
    %115 = arith.cmpi eq, %18, %114 : vector<2x8xi32>
    %116 = vector.shape_cast %113 : vector<2x1xf32> to vector<2x1xf32>
    %117 = vector.broadcast %116 : vector<2x1xf32> to vector<2x8xf32>
    %118 = arith.select %115, %117, %103 : vector<2x8xi1>, vector<2x8xf32>
    %119 = vector.extract_strided_slice %2 {offsets = [0, 6, 0], sizes = [2, 1, 8], strides = [1, 1, 1]} : vector<2x8x8xf32> to vector<2x1x8xf32>
    %120 = vector.shape_cast %119 : vector<2x1x8xf32> to vector<2x8xf32>
    %121 = vector.broadcast %113 : vector<2x1xf32> to vector<2x8xf32>
    %122 = arith.mulf %121, %120 : vector<2x8xf32>
    %123 = arith.addf %108, %122 : vector<2x8xf32>
    %124 = vector.extract_strided_slice %123 {offsets = [0, 7], sizes = [2, 1], strides = [1, 1]} : vector<2x8xf32> to vector<2x1xf32>
    %125 = vector.extract_strided_slice %5 {offsets = [0, 7], sizes = [2, 1], strides = [1, 1]} : vector<2x8xf32> to vector<2x1xf32>
    %126 = arith.mulf %124, %125 : vector<2x1xf32>
    %cst_24 = arith.constant 0.000000e+00 : f32
    %127 = vector.broadcast %cst_24 : f32 to vector<2x1xf32>
    %128 = arith.maximumf %126, %127 : vector<2x1xf32>
    %c7_i32 = arith.constant 7 : i32
    %129 = vector.broadcast %c7_i32 : i32 to vector<2x8xi32>
    %130 = arith.cmpi eq, %18, %129 : vector<2x8xi32>
    %131 = vector.shape_cast %128 : vector<2x1xf32> to vector<2x1xf32>
    %132 = vector.broadcast %131 : vector<2x1xf32> to vector<2x8xf32>
    %133 = arith.select %130, %132, %118 : vector<2x8xi1>, vector<2x8xf32>
    %134 = tpu.concatenate %1, %133, %10 in 1 : vector<2x8xf32>, vector<2x8xf32>, vector<2x4xf32> -> vector<2x20xf32>
    %c0_25 = arith.constant 0 : index
    %c0_26 = arith.constant 0 : index
    %c0_27 = arith.constant 0 : index
    %135 = vector.load %arg6[%c0_25, %c0_26, %c0_27] : memref<2x14x20xf32, #tpu.memory_space<vmem>>, vector<2x14x20xf32>
    %136 = vector.shape_cast %134 : vector<2x20xf32> to vector<2x1x20xf32>
    %137 = vector.broadcast %136 : vector<2x1x20xf32> to vector<2x14x20xf32>
    %138 = arith.mulf %137, %135 : vector<2x14x20xf32>
    %cst_28 = arith.constant dense<0.000000e+00> : vector<2x14xf32>
    %139 = vector.multi_reduction <add>, %138, %cst_28 [2] : vector<2x14x20xf32> to vector<2x14xf32>
    %c0_29 = arith.constant 0 : index
    %c0_30 = arith.constant 0 : index
    %140 = vector.load %arg7[%c0_29, %c0_30] : memref<2x14xf32, #tpu.memory_space<vmem>>, vector<2x14xf32>
    tpu.vector_store %arg7[%c0_29, %c0_30], %139 {strides = array<i32>} : memref<2x14xf32, #tpu.memory_space<vmem>>, vector<2x14xf32>,
    return
  }
}

</mosaic_0001>

<llo_original>
// kernel: custom-call.42
$region0: #{custom-call.42}
  %s0 = inlined_call_operand.vmem [shape: f32[2,4,4], index: 0, kind: input, shape index: {}]
  %s1 = inlined_call_operand.vmem [shape: f32[2,4,4], index: 1, kind: output, shape index: {0}]
  %s2 = inlined_call_operand.hbm [shape: s32[2,4], index: 2, kind: output, shape index: {1}]
  %s3 = inlined_call_operand.vmem [shape: s32[2,4], index: 3, kind: output, shape index: {2}]
  %4 = xla_tuple %s1, %s2, %s3
  $region1: #{custom-call.42} parent=0
    #allocation0 [shape = 'u8[4096]{0}', space=vmem, size = 0x1000, scoped, tag = 'operand span for operand 0']
    #allocation1 [shape = 'u8[4096]{0}', space=vmem, size = 0x1000, scoped, tag = 'packed  for operand 0']
    #allocation2 [shape = 'u8[4096]{0}', space=vmem, size = 0x1000, scoped, tag = 'operand span for operand 1']
    #allocation3 [shape = 'u8[4096]{0}', space=vmem, size = 0x1000, scoped, tag = 'packed  for operand 1']
    #allocation4 [shape = 'u8[4096]{0}', space=vmem, size = 0x1000, scoped, tag = 'operand span for operand 2']
    #allocation5 [shape = 'u8[2048]{0}', space=vmem, size = 0x800, scoped, tag = 'packed  for operand 2']
    #allocation6 [shape = 's32[2]{0}', space=sflag, size = 0x8, scoped, tag = 'scoped memory for custom-call.42']
    #allocation7 [shape = 'u8[4096]{0}', space=vmem, size = 0x1000, scoped, tag = 'operand span for operand 3']
    #allocation8 [shape = 'u8[2048]{0}', space=vmem, size = 0x800, scoped, tag = 'packed  for operand 3']
    %5 = vsyncpa [#allocation6], 0
    %s6 = scalar_lea.sflag [#allocation6], 1
    %7 = vsyncpa %s6, 0
    loop: start=0, step=1, limit=4
    $region2: #{custom-call.42} parent=1 // loop_pre_header
      _
    $region3: #{custom-call.42} parent=1 // loop_header
      %s9 = sphi 0, %s13
      %p10 = scmp.ge.s32.totalorder %s9, 4
      %s21 = sphi 0, %s23
      %s24 = sphi 0, %s21
      %s25 = sphi 0, %s24
      %s41 = sphi 0, %s25
      %s49 = sphi 0, %s51
      %s52 = sphi 0, %s49
      %s53 = sphi 0, %s52
      %s69 = sphi 0, %s53
    $region4: #{custom-call.42} parent=1 // loop_header_branch
      %12 = sbr.rel (%p10) target = $region8
    $region5: #{custom-call.42} parent=1 // loop_body
      %s14 = ssub.s32 %s9, 1
      %s15 = ssub.s32 %s9, 2
      %s16 = sadd.s32 %s9, 1
      %s17 = sshrl.u32 %s9, 3
      %s18 = sshrl.u32 %s16, 3
      %s19 = ssub.s32 %s17, %s18
      %p20 = scmp.eq.s32.totalorder %s19, 0
      %s22 = sadd.s32 %s21, 1
      %s23 = scalar_select %p20, %s21, %s22
      %p26 = pneg %p20
      %p27 = scmp.eq.s32.totalorder %s9, 1
      %p28 = por %p26, %p27
      %p29 = scmp.ne.s32.totalorder %s21, %s24
      %p30 = scmp.eq.s32.totalorder %s9, 0
      %p31 = por %p29, %p30
      %p32 = scmp.ne.s32.totalorder %s21, %s24
      %p33 = scmp.eq.s32.totalorder %s14, 1
      %p34 = por %p32, %p33
      %p35 = scmp.ne.s32.totalorder %s24, %s25
      %p36 = scmp.eq.s32.totalorder %s14, 0
      %p37 = por %p35, %p36
      %p38 = scmp.ne.s32.totalorder %s24, %s25
      %p39 = scmp.eq.s32.totalorder %s15, 1
      %p40 = por %p38, %p39
      %p42 = scmp.ne.s32.totalorder %s25, %s41
      %p43 = scmp.eq.s32.totalorder %s15, 0
      %p44 = por %p42, %p43
      %s45 = sshrl.u32 %s9, 3
      %s46 = sshrl.u32 %s16, 3
      %s47 = ssub.s32 %s45, %s46
      %p48 = scmp.eq.s32.totalorder %s47, 0
      %s50 = sadd.s32 %s49, 1
      %s51 = scalar_select %p48, %s49, %s50
      %p54 = pneg %p48
      %p55 = scmp.eq.s32.totalorder %s9, 1
      %p56 = por %p54, %p55
      %p57 = scmp.ne.s32.totalorder %s49, %s52
      %p58 = scmp.eq.s32.totalorder %s9, 0
      %p59 = por %p57, %p58
      %p60 = scmp.ne.s32.totalorder %s49, %s52
      %p61 = scmp.eq.s32.totalorder %s14, 1
      %p62 = por %p60, %p61
      %p63 = scmp.ne.s32.totalorder %s52, %s53
      %p64 = scmp.eq.s32.totalorder %s14, 0
      %p65 = por %p63, %p64
      %p66 = scmp.ne.s32.totalorder %s52, %s53
      %p67 = scmp.eq.s32.totalorder %s15, 1
      %p68 = por %p66, %p67
      %p70 = scmp.ne.s32.totalorder %s53, %s69
      %p71 = scmp.eq.s32.totalorder %s15, 0
      %p72 = por %p70, %p71
      %p73 = scmp.le.s32.totalorder 1, %s9
      %p74 = scmp.lt.s32.totalorder %s9, 3
      %p75 = pnand %p73, %p74
      %p76 = pneg %p75
      // Predicated region
      $region9: #{custom-call.42} parent=5 // pred_check
        _
      $region10: #{custom-call.42} parent=5 // pred_check_branch
        %78 = sbr.rel (%p75) target = $region12
      $region11: #{custom-call.42} parent=5 // pred_region
        %s79 = ssub.s32 %s9, 1
      $region12: #{custom-call.42} parent=5 // pred_fallthru
        _
      %p80 = scmp.lt.s32.totalorder %s9, 2
      // Predicated region
      $region13: #{custom-call.42} parent=5 // pred_check
        %p81 = pneg %p80
      $region14: #{custom-call.42} parent=5 // pred_check_branch
        %83 = sbr.rel (%p81) target = $region16
      $region15: #{custom-call.42} parent=5 // pred_region
        %s84 = sand.u32 %s9, 1
        %s85 = sand.u32 %s9, 1
        %s86 = smul.addr %s85, 4
        %s87 = scalar_lea.vmem [#allocation1], %s86
        %s88 = smul.addr %s9, 4
        %s89 = scalar_lea.vmem %s0, %s88
        // Predicated region
        $region17: #{custom-call.42} parent=15 // pred_check
          _
        $region18: #{custom-call.42} parent=15 // pred_check_branch
          %91 = sbr.rel (0) target = $region20
        $region19: #{custom-call.42} parent=15 // pred_region
          // Predicated region
          $region21: #{custom-call.42} parent=19 // pred_check
            _
          $region22: #{custom-call.42} parent=19 // pred_check_branch
            %93 = sbr.rel target = $region24
          $region23: #{custom-call.42} parent=19 // pred_region
            // Predicated region
            $region36: #{custom-call.42} parent=23 // pred_check
              _
            $region37: #{custom-call.42} parent=23 // pred_check_branch
              %109 = sbr.rel (0) target = $region39
            $region38: #{custom-call.42} parent=23 // pred_region
              %s111 = ssub.s32 16, 1
              loop: start=0, step=1, limit=1
              $region40: #{custom-call.42} parent=38 // loop_pre_header
                _
              $region41: #{custom-call.42} parent=38 // loop_header
                %s113 = sphi 0, %s117
                %p114 = scmp.ge.s32.totalorder %s113, 1
                %s118 = sphi %s89, %s89
                %s119 = sphi %s87, %s87
              $region42: #{custom-call.42} parent=38 // loop_header_branch
                %116 = sbr.rel (%p114) target = $region46
              $region43: #{custom-call.42} parent=38 // loop_body
                %v120 = vld [vmem:[%s118] sm:%s111]
                %121 = vst [vmem:[%s119] sm:%s111] %v120
              $region44: #{custom-call.42} parent=38 // loop_footer
                %s117 = sadd.s32 1, %s113
              $region45: #{custom-call.42} parent=38 // loop_footer_branch
                %112 = sbr.rel target = $region41
              $region46: #{custom-call.42} parent=38 // loop_exit
                _
            $region39: #{custom-call.42} parent=23 // pred_fallthru
              _
          $region24: #{custom-call.42} parent=19 // pred_fallthru
            _
          // Predicated region
          $region25: #{custom-call.42} parent=19 // pred_check
            _
          $region26: #{custom-call.42} parent=19 // pred_check_branch
            %95 = sbr.rel (0) target = $region28
          $region27: #{custom-call.42} parent=19 // pred_region
            %s97 = ssub.s32 16, 1
            loop: start=0, step=1, limit=1
            $region29: #{custom-call.42} parent=27 // loop_pre_header
              _
            $region30: #{custom-call.42} parent=27 // loop_header
              %s99 = sphi 0, %s103
              %p100 = scmp.ge.s32.totalorder %s99, 1
              %s104 = sphi %s89, %s89
              %s105 = sphi %s87, %s87
            $region31: #{custom-call.42} parent=27 // loop_header_branch
              %102 = sbr.rel (%p100) target = $region35
            $region32: #{custom-call.42} parent=27 // loop_body
              %v106 = vld [vmem:[%s104] sm:%s97]
              %107 = vst [vmem:[%s105] sm:%s97] %v106
            $region33: #{custom-call.42} parent=27 // loop_footer
              %s103 = sadd.s32 1, %s99
            $region34: #{custom-call.42} parent=27 // loop_footer_branch
              %98 = sbr.rel target = $region30
            $region35: #{custom-call.42} parent=27 // loop_exit
              _
          $region28: #{custom-call.42} parent=19 // pred_fallthru
            _
        $region20: #{custom-call.42} parent=15 // pred_fallthru
          _
        %122 = vnop
      $region16: #{custom-call.42} parent=5 // pred_fallthru
        _
      %p123 = scmp.le.s32.totalorder 1, %s9
      %p124 = scmp.lt.s32.totalorder %s9, 3
      %p125 = pnand %p123, %p124
      %p126 = pneg %p125
      // Predicated region
      $region47: #{custom-call.42} parent=5 // pred_check
        _
      $region48: #{custom-call.42} parent=5 // pred_check_branch
        %128 = sbr.rel (%p125) target = $region50
      $region49: #{custom-call.42} parent=5 // pred_region
        #allocation9 [shape = 's32[4,128]{1,0}', space=vmem, size = 0x1000, scoped, tag = 'scratch for permutations']
        %s129 = ssub.s32 %s9, 1
        %s130 = sand.u32 %s14, 1
        %s131 = sand.u32 %s14, 1
        %s132 = smul.addr %s131, 4
        %s133 = scalar_lea.vmem [#allocation1], %s132
        %s134 = sand.u32 %s14, 1
        %s135 = sand.u32 %s14, 1
        %s136 = smul.addr %s135, 4
        %s137 = scalar_lea.vmem [#allocation1], %s136
        %s138 = sand.u32 %s14, 1
        %s139 = sand.u32 %s14, 1
        %s140 = smul.addr %s139, 4
        %s141 = scalar_lea.vmem [#allocation3], %s140
        %p142 = pneg %p37
        %p143 = pneg %p34
        %s144 = sand.u32 %s24, 1
        %s145 = scalar_lea.sflag [#allocation6], %s144
        %s146 = sand.u32 %s24, 1
        %s147 = smul.addr %s146, 2
        %s148 = scalar_lea.vmem [#allocation5], %s147
        %p149 = pneg %p65
        %p150 = pneg %p62
        %s151 = sand.u32 %s52, 1
        %s152 = sand.u32 %s52, 1
        %s153 = smul.addr %s152, 2
        %s154 = scalar_lea.vmem [#allocation8], %s153
        %s156 = sshll.u32 1, 4
        %s157 = ssub.s32 %s156, 1
        %v158 = vld [vmem:[%s137] sm:%s157]
        %159 = vst [vmem:[#allocation0] sm:%s157] %v158
        %s160 = sshrl.u32 %s14, 3
        %s161 = sshrl.u32 %s14, 3
        %v162 = vld [vmem:[#allocation0] sm:$0xff]
        %163 = vst [vmem:[#allocation2] sm:$0xff] %v162
        %s164 = sand.u32 %s14, 7
        %s165 = scalar_lea.vmem [#allocation4], %s164
        %s166 = sand.u32 %s14, 7
        %s167 = scalar_lea.vmem [#allocation7], %s166
        %168 = vst [vmem:[%s165] sm:$0x1] 0
        %v169 = vlaneseq
        %v170 = vshrl.u32 %v169, 7
        %v171 = vmov %v170
        %173 = vst [vmem:[#allocation9] sm:$0xff] %v171
        loop: start=0, step=1, limit=4
        $region52: #{custom-call.42} parent=49 // loop_pre_header
          _
        $region53: #{custom-call.42} parent=49 // loop_header
          %s175 = sphi 0, %s179
          %p176 = scmp.ge.s32.totalorder %s175, 4
        $region54: #{custom-call.42} parent=49 // loop_header_branch
          %178 = sbr.rel (%p176) target = $region58
        $region55: #{custom-call.42} parent=49 // loop_body
          %v180 = vstv %s175
          %v181 = vlaneseq
          %v182 = vshrl.u32 %v181, 7
          %v183 = vmov %v182
          %v184 = vld [vmem:[#allocation2] sm:$0xff]
          %v185 = vand.u32 2147483647, %v184
          %v187 = vstv %s175
          %vm188 = vcmp.ge.s32.totalorder %v183, %v187
          %vm189 = vcmp.lt.s32.totalorder %v183, 4
          %vm190 = vmand %vm188, %vm189
          %vm191 = vcmp.lt.f32.partialorder -inf, %v185
          %vm192 = vmand %vm190, %vm191
          %v193 = vsel %vm192, %v183, %v180
          %v194 = vsel %vm192, %v185, -inf
          %v195 = vrot.slane %v194, 1
          %v196 = vrot.slane %v193, 1
          %vm197 = vcmp.ge.f32.partialorder %v195, %v194
          %v198 = vsel %vm197, %v195, %v194
          %v199 = vsel %vm197, %v196, %v193
          %v200 = vrot.slane %v195, 1
          %v201 = vrot.slane %v196, 1
          %vm202 = vcmp.ge.f32.partialorder %v200, %v198
          %v203 = vsel %vm202, %v200, %v198
          %v204 = vsel %vm202, %v201, %v199
          %v205 = vrot.slane %v200, 1
          %v206 = vrot.slane %v201, 1
          %vm207 = vcmp.ge.f32.partialorder %v205, %v203
          %v208 = vsel %vm207, %v205, %v203
          %v209 = vsel %vm207, %v206, %v204
          %v210 = vrot.slane %v205, 1
          %v211 = vrot.slane %v206, 1
          %vm212 = vcmp.ge.f32.partialorder %v210, %v208
          %v213 = vsel %vm212, %v210, %v208
          %v214 = vsel %vm212, %v211, %v209
          %v215 = vrot.slane %v210, 1
          %v216 = vrot.slane %v211, 1
          %vm217 = vcmp.ge.f32.partialorder %v215, %v213
          %v218 = vsel %vm217, %v215, %v213
          %v219 = vsel %vm217, %v216, %v214
          %v220 = vrot.slane %v215, 1
          %v221 = vrot.slane %v216, 1
          %vm222 = vcmp.ge.f32.partialorder %v220, %v218
          %v223 = vsel %vm222, %v220, %v218
          %v224 = vsel %vm222, %v221, %v219
          %v225 = vrot.slane %v220, 1
          %v226 = vrot.slane %v221, 1
          %vm227 = vcmp.ge.f32.partialorder %v225, %v223
          %v228 = vsel %vm227, %v225, %v223
          %v229 = vsel %vm227, %v226, %v224
          %s230 = ssub.s32 128, %s175
          %231 = vrot.lane.b32.xlu0 %v229, %s230
          %v232 = vpop.permute.xlu0 %231
          %s233 = vtos %v232
          %v234 = vstv %s175
          %v235 = vlaneseq
          %v236 = vand.u32 %v235, 127
          %vm237 = vcmp.eq.s32.totalorder %v236, %v234
          %v238 = vstv %s233
          %v239 = vld [vmem:[%s165] ss:$0 sm:$0xff]
          %v240 = vsel %vm237, %v238, %v239
          %241 = vst [vmem:[%s165] sm:$0x1] %v240
          %s242 = scalar_lea.vmem [#allocation2], %s175
          %s243 = scalar_lea.vmem [#allocation2], %s233
          %v244 = vld [vmem:[%s242] ss:$0 sm:$0xff]
          %v245 = vld [vmem:[%s243] ss:$0 sm:$0xff]
          %246 = vst [vmem:[%s243] sm:$0x1] %v244
          %247 = vst [vmem:[%s242] sm:$0x1] %v245
          %s248 = scalar_lea.vmem [#allocation9], %s175
          %s249 = scalar_lea.vmem [#allocation9], %s233
          %v250 = vld [vmem:[%s248] ss:$0 sm:$0xff]
          %v251 = vld [vmem:[%s249] ss:$0 sm:$0xff]
          %252 = vst [vmem:[%s249] sm:$0x1] %v250
          %253 = vst [vmem:[%s248] sm:$0x1] %v251
          %vm254 = vcmp.ne.f32.partialorder %v245, 0.0
          %vm255 = vmand %vm237, %vm254
          %v256 = vsel %vm255, %v245, 1.0
          %v257 = vlaneseq
          %v258 = vand.u32 %v257, 127
          %v259 = vstv %s175
          %vm260 = vcmp.gt.s32.totalorder %v258, %v259
          %v261 = vsel %vm260, %v245, 0.0
          %v262 = vlaneseq
          %v263 = vshrl.u32 %v262, 7
          %v264 = vmov %v263
          %v265 = vld [vmem:[#allocation2] sm:$0xff]
          %v267 = vstv %s175
          %vm268 = vcmp.gt.s32.totalorder %v264, %v267
          %v269 = vsel %vm268, %v256, 1.0
          %v270 = vrcp.pop %v269
          %v271 = vmul.f32 %v265, %v270
          %vm272 = vmand %vm268, %vm237
          %v273 = vsel %vm272, %v271, 0.0
          %274 = vadd.xlane.f32.xlu0 %v273
          %v275 = vpop.xlane.xlu0 %274
          %v276 = vmul.f32 %v275, %v261
          %v277 = vsub.f32 %v271, %v276
          %278 = vst [vmem:[#allocation2] sm:$0xff] %v277
        $region56: #{custom-call.42} parent=49 // loop_footer
          %s179 = sadd.s32 1, %s175
        $region57: #{custom-call.42} parent=49 // loop_footer_branch
          %174 = sbr.rel target = $region53
        $region58: #{custom-call.42} parent=49 // loop_exit
          _
        %v279 = vld [vmem:[#allocation9] sm:$0xff]
        %s280 = scalar_lea.vmem [#allocation9], 8
        %s281 = scalar_lea.vmem [#allocation9], 16
        %s282 = scalar_lea.vmem [#allocation9], 24
        %s283 = scalar_lea.vmem [#allocation9], 32
        %s284 = scalar_lea.vmem [#allocation9], 40
        %s285 = scalar_lea.vmem [#allocation9], 48
        %s286 = scalar_lea.vmem [#allocation9], 56
        %s287 = scalar_lea.vmem [#allocation9], 64
        %s288 = scalar_lea.vmem [#allocation9], 72
        %s289 = scalar_lea.vmem [#allocation9], 80
        %s290 = scalar_lea.vmem [#allocation9], 88
        %s291 = scalar_lea.vmem [#allocation9], 96
        %s292 = scalar_lea.vmem [#allocation9], 104
        %s293 = scalar_lea.vmem [#allocation9], 112
        %s294 = scalar_lea.vmem [#allocation9], 120
        %295 = vxpose.xlu0.b32.start [1/16] %v279, 128
        %296 = vxpose.xlu0.b32.cont [2/16] 0, 128
        %297 = vxpose.xlu0.b32.cont [3/16] 0, 128
        %298 = vxpose.xlu0.b32.cont [4/16] 0, 128
        %299 = vxpose.xlu0.b32.cont [5/16] 0, 128
        %300 = vxpose.xlu0.b32.cont [6/16] 0, 128
        %301 = vxpose.xlu0.b32.cont [7/16] 0, 128
        %302 = vxpose.xlu0.b32.cont [8/16] 0, 128
        %303 = vxpose.xlu0.b32.cont [9/16] 0, 128
        %304 = vxpose.xlu0.b32.cont [10/16] 0, 128
        %305 = vxpose.xlu0.b32.cont [11/16] 0, 128
        %306 = vxpose.xlu0.b32.cont [12/16] 0, 128
        %307 = vxpose.xlu0.b32.cont [13/16] 0, 128
        %308 = vxpose.xlu0.b32.cont [14/16] 0, 128
        %309 = vxpose.xlu0.b32.cont [15/16] 0, 128
        %310 = vxpose.xlu0.b32.end [16/16] 0, 128
        %v311 = vpop.trf.xlu0
        %v312 = vpop.trf.xlu0
        %v313 = vpop.trf.xlu0
        %v314 = vpop.trf.xlu0
        %v315 = vpop.trf.xlu0
        %v316 = vpop.trf.xlu0
        %v317 = vpop.trf.xlu0
        %v318 = vpop.trf.xlu0
        %v319 = vpop.trf.xlu0
        %v320 = vpop.trf.xlu0
        %v321 = vpop.trf.xlu0
        %v322 = vpop.trf.xlu0
        %v323 = vpop.trf.xlu0
        %v324 = vpop.trf.xlu0
        %v325 = vpop.trf.xlu0
        %v326 = vpop.trf.xlu0
        %327 = vst [vmem:[%s167] sm:$0x1] %v311
        %s329 = sshll.u32 1, 4
        %s330 = ssub.s32 %s329, 1
        %v332 = vld [vmem:[#allocation2] sm:%s330]
        %s333 = sshll.u32 1, 4
        %s334 = ssub.s32 %s333, 1
        %335 = vst [vmem:[%s141] sm:%s334] %v332
        %s337 = sshll.u32 1, 2
        %s338 = ssub.s32 %s337, 1
        %v340 = vld [vmem:[#allocation4] sm:%s338]
        %s341 = sshll.u32 1, 2
        %s342 = ssub.s32 %s341, 1
        %343 = vst [vmem:[%s148] sm:%s342] %v340
        %s345 = sshll.u32 1, 2
        %s346 = ssub.s32 %s345, 1
        %v348 = vld [vmem:[#allocation7] sm:%s346]
        %s349 = sshll.u32 1, 2
        %s350 = ssub.s32 %s349, 1
        %351 = vst [vmem:[%s154] sm:%s350] %v348
        %s352 = sand.u32 %s14, 1
        %s353 = sand.u32 %s14, 1
        %s354 = smul.addr %s353, 4
        %s355 = scalar_lea.vmem [#allocation3], %s354
        %s356 = sand.u32 %s24, 1
        %s357 = scalar_lea.sflag [#allocation6], %s356
        %s358 = sand.u32 %s24, 1
        %s359 = smul.addr %s358, 2
        %s360 = scalar_lea.vmem [#allocation5], %s359
        %s361 = sand.u32 %s52, 1
        %s362 = sand.u32 %s52, 1
        %s363 = smul.addr %s362, 2
        %s364 = scalar_lea.vmem [#allocation8], %s363
        %s365 = smul.addr %s14, 4
        %s366 = scalar_lea.vmem %s1, %s365
        // Predicated region
        $region59: #{custom-call.42} parent=49 // pred_check
          _
        $region60: #{custom-call.42} parent=49 // pred_check_branch
          %368 = sbr.rel (0) target = $region62
        $region61: #{custom-call.42} parent=49 // pred_region
          // Predicated region
          $region63: #{custom-call.42} parent=61 // pred_check
            _
          $region64: #{custom-call.42} parent=61 // pred_check_branch
            %370 = sbr.rel target = $region66
          $region65: #{custom-call.42} parent=61 // pred_region
            // Predicated region
            $region78: #{custom-call.42} parent=65 // pred_check
              _
            $region79: #{custom-call.42} parent=65 // pred_check_branch
              %386 = sbr.rel (0) target = $region81
            $region80: #{custom-call.42} parent=65 // pred_region
              %s388 = ssub.s32 16, 1
              loop: start=0, step=1, limit=1
              $region82: #{custom-call.42} parent=80 // loop_pre_header
                _
              $region83: #{custom-call.42} parent=80 // loop_header
                %s390 = sphi 0, %s394
                %p391 = scmp.ge.s32.totalorder %s390, 1
                %s395 = sphi %s355, %s355
                %s396 = sphi %s366, %s366
              $region84: #{custom-call.42} parent=80 // loop_header_branch
                %393 = sbr.rel (%p391) target = $region88
              $region85: #{custom-call.42} parent=80 // loop_body
                %v397 = vld [vmem:[%s395] sm:%s388]
                %398 = vst [vmem:[%s396] sm:%s388] %v397
              $region86: #{custom-call.42} parent=80 // loop_footer
                %s394 = sadd.s32 1, %s390
              $region87: #{custom-call.42} parent=80 // loop_footer_branch
                %389 = sbr.rel target = $region83
              $region88: #{custom-call.42} parent=80 // loop_exit
                _
            $region81: #{custom-call.42} parent=65 // pred_fallthru
              _
          $region66: #{custom-call.42} parent=61 // pred_fallthru
            _
          // Predicated region
          $region67: #{custom-call.42} parent=61 // pred_check
            _
          $region68: #{custom-call.42} parent=61 // pred_check_branch
            %372 = sbr.rel (0) target = $region70
          $region69: #{custom-call.42} parent=61 // pred_region
            %s374 = ssub.s32 16, 1
            loop: start=0, step=1, limit=1
            $region71: #{custom-call.42} parent=69 // loop_pre_header
              _
            $region72: #{custom-call.42} parent=69 // loop_header
              %s376 = sphi 0, %s380
              %p377 = scmp.ge.s32.totalorder %s376, 1
              %s381 = sphi %s355, %s355
              %s382 = sphi %s366, %s366
            $region73: #{custom-call.42} parent=69 // loop_header_branch
              %379 = sbr.rel (%p377) target = $region77
            $region74: #{custom-call.42} parent=69 // loop_body
              %v383 = vld [vmem:[%s381] sm:%s374]
              %384 = vst [vmem:[%s382] sm:%s374] %v383
            $region75: #{custom-call.42} parent=69 // loop_footer
              %s380 = sadd.s32 1, %s376
            $region76: #{custom-call.42} parent=69 // loop_footer_branch
              %375 = sbr.rel target = $region72
            $region77: #{custom-call.42} parent=69 // loop_exit
              _
          $region70: #{custom-call.42} parent=61 // pred_fallthru
            _
        $region62: #{custom-call.42} parent=49 // pred_fallthru
          _
        %399 = vnop
        // Predicated region
        $region89: #{custom-call.42} parent=49 // pred_check
          %p400 = pneg %p34
        $region90: #{custom-call.42} parent=49 // pred_check_branch
          %402 = sbr.rel (%p400) target = $region92
        $region91: #{custom-call.42} parent=49 // pred_region
          %s403 = sshrl.u32 %s14, 3
          %s405 = ssub.s32 32, 32
          %406 = vsyncadd %s357, %s405
          %s407 = smul.addr %s403, 32
          %s408 = scalar_lea.hbm %s2, %s407
          %s410 = sshll.u32 %s360, 4
          %s411 = int_to_ptr.vmem [resolvable:$true] %s410
          %413 = dma.vmem_to_hbm [thread:$0]  %s411, 32, %s408, %s357
        $region92: #{custom-call.42} parent=49 // pred_fallthru
          _
        // Predicated region
        $region93: #{custom-call.42} parent=49 // pred_check
          %p414 = pneg %p62
        $region94: #{custom-call.42} parent=49 // pred_check_branch
          %416 = sbr.rel (%p414) target = $region96
        $region95: #{custom-call.42} parent=49 // pred_region
          %s417 = sshrl.u32 %s14, 3
          %s418 = smul.addr %s417, 2
          %s419 = scalar_lea.vmem %s3, %s418
          // Predicated region
          $region97: #{custom-call.42} parent=95 // pred_check
            _
          $region98: #{custom-call.42} parent=95 // pred_check_branch
            %421 = sbr.rel (0) target = $region100
          $region99: #{custom-call.42} parent=95 // pred_region
            // Predicated region
            $region101: #{custom-call.42} parent=99 // pred_check
              _
            $region102: #{custom-call.42} parent=99 // pred_check_branch
              %423 = sbr.rel target = $region104
            $region103: #{custom-call.42} parent=99 // pred_region
              // Predicated region
              $region116: #{custom-call.42} parent=103 // pred_check
                _
              $region117: #{custom-call.42} parent=103 // pred_check_branch
                %439 = sbr.rel (0) target = $region119
              $region118: #{custom-call.42} parent=103 // pred_region
                %s441 = ssub.s32 4, 1
                loop: start=0, step=1, limit=1
                $region120: #{custom-call.42} parent=118 // loop_pre_header
                  _
                $region121: #{custom-call.42} parent=118 // loop_header
                  %s443 = sphi 0, %s447
                  %p444 = scmp.ge.s32.totalorder %s443, 1
                  %s448 = sphi %s364, %s364
                  %s449 = sphi %s419, %s419
                $region122: #{custom-call.42} parent=118 // loop_header_branch
                  %446 = sbr.rel (%p444) target = $region126
                $region123: #{custom-call.42} parent=118 // loop_body
                  %v450 = vld [vmem:[%s448] sm:%s441]
                  %451 = vst [vmem:[%s449] sm:%s441] %v450
                $region124: #{custom-call.42} parent=118 // loop_footer
                  %s447 = sadd.s32 1, %s443
                $region125: #{custom-call.42} parent=118 // loop_footer_branch
                  %442 = sbr.rel target = $region121
                $region126: #{custom-call.42} parent=118 // loop_exit
                  _
              $region119: #{custom-call.42} parent=103 // pred_fallthru
                _
            $region104: #{custom-call.42} parent=99 // pred_fallthru
              _
            // Predicated region
            $region105: #{custom-call.42} parent=99 // pred_check
              _
            $region106: #{custom-call.42} parent=99 // pred_check_branch
              %425 = sbr.rel (0) target = $region108
            $region107: #{custom-call.42} parent=99 // pred_region
              %s427 = ssub.s32 4, 1
              loop: start=0, step=1, limit=1
              $region109: #{custom-call.42} parent=107 // loop_pre_header
                _
              $region110: #{custom-call.42} parent=107 // loop_header
                %s429 = sphi 0, %s433
                %p430 = scmp.ge.s32.totalorder %s429, 1
                %s434 = sphi %s364, %s364
                %s435 = sphi %s419, %s419
              $region111: #{custom-call.42} parent=107 // loop_header_branch
                %432 = sbr.rel (%p430) target = $region115
              $region112: #{custom-call.42} parent=107 // loop_body
                %v436 = vld [vmem:[%s434] sm:%s427]
                %437 = vst [vmem:[%s435] sm:%s427] %v436
              $region113: #{custom-call.42} parent=107 // loop_footer
                %s433 = sadd.s32 1, %s429
              $region114: #{custom-call.42} parent=107 // loop_footer_branch
                %428 = sbr.rel target = $region110
              $region115: #{custom-call.42} parent=107 // loop_exit
                _
            $region108: #{custom-call.42} parent=99 // pred_fallthru
              _
          $region100: #{custom-call.42} parent=95 // pred_fallthru
            _
          %452 = vnop
        $region96: #{custom-call.42} parent=49 // pred_fallthru
          _
      $region50: #{custom-call.42} parent=5 // pred_fallthru
        _
      %p453 = scmp.le.s32.totalorder 2, %s9
      // Predicated region
      $region127: #{custom-call.42} parent=5 // pred_check
        %p454 = pneg %p453
      $region128: #{custom-call.42} parent=5 // pred_check_branch
        %456 = sbr.rel (%p454) target = $region130
      $region129: #{custom-call.42} parent=5 // pred_region
        %s457 = ssub.s32 %s9, 2
        %s458 = sand.u32 %s15, 1
        %s459 = sand.u32 %s15, 1
        %s460 = smul.addr %s459, 4
        %s461 = scalar_lea.vmem [#allocation3], %s460
        // Predicated region
        $region131: #{custom-call.42} parent=129 // pred_check
          %p462 = pneg %p40
        $region132: #{custom-call.42} parent=129 // pred_check_branch
          %464 = sbr.rel (%p462) target = $region134
        $region133: #{custom-call.42} parent=129 // pred_region
          %s465 = sand.u32 %s25, 1
          %s466 = scalar_lea.sflag [#allocation6], %s465
          %s467 = sand.u32 %s25, 1
          %s468 = smul.addr %s467, 2
          %s469 = scalar_lea.vmem [#allocation5], %s468
          %470 = dma.done %s466, 32
        $region134: #{custom-call.42} parent=129 // pred_fallthru
          _
        // Predicated region
        $region135: #{custom-call.42} parent=129 // pred_check
          %p471 = pneg %p68
        $region136: #{custom-call.42} parent=129 // pred_check_branch
          %473 = sbr.rel (%p471) target = $region138
        $region137: #{custom-call.42} parent=129 // pred_region
          %s474 = sand.u32 %s53, 1
          %s475 = sand.u32 %s53, 1
          %s476 = smul.addr %s475, 2
          %s477 = scalar_lea.vmem [#allocation8], %s476
        $region138: #{custom-call.42} parent=129 // pred_fallthru
          _
      $region130: #{custom-call.42} parent=5 // pred_fallthru
        _
    $region6: #{custom-call.42} parent=1 // loop_footer
      %s13 = sadd.s32 1, %s9
    $region7: #{custom-call.42} parent=1 // loop_footer_branch
      %8 = sbr.rel target = $region3
    $region8: #{custom-call.42} parent=1 // loop_exit
      _
    %478 = vsyncpa [#allocation6], 1
    %s479 = scalar_lea.sflag [#allocation6], 1
    %480 = vsyncpa %s479, 1

// kernel: custom-call.44
$region0: #{custom-call.44}
  %s0 = inlined_call_operand.vmem [shape: f32[2,1,4,4], index: 0, kind: input, shape index: {}]
  %s1 = inlined_call_operand.vmem [shape: f32[2,1,4,4], index: 1, kind: output, shape index: {}]
  $region1: #{custom-call.44} parent=0
    #allocation0 [shape = 'u8[4096]{0}', space=vmem, size = 0x1000, scoped, tag = 'operand span for operand 0']
    #allocation1 [shape = 'u8[4096]{0}', space=vmem, size = 0x1000, scoped, tag = 'packed  for operand 0']
    #allocation2 [shape = 'u8[4096]{0}', space=vmem, size = 0x1000, scoped, tag = 'operand span for operand 1']
    #allocation3 [shape = 'u8[4096]{0}', space=vmem, size = 0x1000, scoped, tag = 'packed  for operand 1']
    loop: start=0, step=1, limit=4
    $region2: #{custom-call.44} parent=1 // loop_pre_header
      _
    $region3: #{custom-call.44} parent=1 // loop_header
      %s3 = sphi 0, %s7
      %p4 = scmp.ge.s32.totalorder %s3, 4
      %s10 = sphi 0, %s36
      %s11 = sphi 0, %s32
      %s12 = sphi 0, %s28
      %s13 = sphi 0, %s24
      %s14 = sphi 0, %s10
      %s15 = sphi 0, %s11
      %s16 = sphi 0, %s12
      %s17 = sphi 0, %s13
      %s18 = sphi 0, %s14
      %s19 = sphi 0, %s15
      %s20 = sphi 0, %s16
      %s21 = sphi 0, %s17
    $region4: #{custom-call.44} parent=1 // loop_header_branch
      %6 = sbr.rel (%p4) target = $region8
    $region5: #{custom-call.44} parent=1 // loop_body
      %s8 = ssub.s32 %s3, 1
      %s9 = ssub.s32 %s3, 2
      %s22 = sadd.s32 1, %s13
      %p23 = scmp.ge.s32.totalorder %s22, 1
      %s24 = scalar_select %p23, 0, %s22
      %s25 = sadd.s32 1, %s12
      %s26 = scalar_select %p23, %s25, %s12
      %p27 = scmp.ge.s32.totalorder %s26, 1
      %s28 = scalar_select %p27, 0, %s26
      %s29 = sadd.s32 1, %s11
      %s30 = scalar_select %p27, %s29, %s11
      %p31 = scmp.ge.s32.totalorder %s30, 1
      %s32 = scalar_select %p31, 0, %s30
      %s33 = sadd.s32 1, %s10
      %s34 = scalar_select %p31, %s33, %s10
      %p35 = scmp.ge.s32.totalorder %s34, 2
      %s36 = scalar_select %p35, 0, %s34
      %p37 = scmp.le.s32.totalorder 1, %s3
      %p38 = scmp.lt.s32.totalorder %s3, 3
      %p39 = pnand %p37, %p38
      %p40 = pneg %p39
      // Predicated region
      $region9: #{custom-call.44} parent=5 // pred_check
        _
      $region10: #{custom-call.44} parent=5 // pred_check_branch
        %42 = sbr.rel (%p39) target = $region12
      $region11: #{custom-call.44} parent=5 // pred_region
        %s43 = ssub.s32 %s3, 1
      $region12: #{custom-call.44} parent=5 // pred_fallthru
        _
      %p44 = scmp.lt.s32.totalorder %s3, 2
      // Predicated region
      $region13: #{custom-call.44} parent=5 // pred_check
        %p45 = pneg %p44
      $region14: #{custom-call.44} parent=5 // pred_check_branch
        %47 = sbr.rel (%p45) target = $region16
      $region15: #{custom-call.44} parent=5 // pred_region
        %s48 = sand.u32 %s3, 1
        %s49 = sand.u32 %s3, 1
        %s50 = smul.addr %s49, 4
        %s51 = scalar_lea.vmem [#allocation1], %s50
        %s52 = sadd.s32 %s13, %s12
        %s53 = sadd.s32 %s52, %s11
        %s54 = sadd.s32 %s53, %s10
        %s55 = smul.addr %s54, 4
        %s56 = scalar_lea.vmem %s0, %s55
        // Predicated region
        $region17: #{custom-call.44} parent=15 // pred_check
          _
        $region18: #{custom-call.44} parent=15 // pred_check_branch
          %58 = sbr.rel (0) target = $region20
        $region19: #{custom-call.44} parent=15 // pred_region
          // Predicated region
          $region21: #{custom-call.44} parent=19 // pred_check
            _
          $region22: #{custom-call.44} parent=19 // pred_check_branch
            %60 = sbr.rel target = $region24
          $region23: #{custom-call.44} parent=19 // pred_region
            // Predicated region
            $region36: #{custom-call.44} parent=23 // pred_check
              _
            $region37: #{custom-call.44} parent=23 // pred_check_branch
              %76 = sbr.rel (0) target = $region39
            $region38: #{custom-call.44} parent=23 // pred_region
              %s78 = ssub.s32 16, 1
              loop: start=0, step=1, limit=1
              $region40: #{custom-call.44} parent=38 // loop_pre_header
                _
              $region41: #{custom-call.44} parent=38 // loop_header
                %s80 = sphi 0, %s84
                %p81 = scmp.ge.s32.totalorder %s80, 1
                %s85 = sphi %s56, %s56
                %s86 = sphi %s51, %s51
              $region42: #{custom-call.44} parent=38 // loop_header_branch
                %83 = sbr.rel (%p81) target = $region46
              $region43: #{custom-call.44} parent=38 // loop_body
                %v87 = vld [vmem:[%s85] sm:%s78]
                %88 = vst [vmem:[%s86] sm:%s78] %v87
              $region44: #{custom-call.44} parent=38 // loop_footer
                %s84 = sadd.s32 1, %s80
              $region45: #{custom-call.44} parent=38 // loop_footer_branch
                %79 = sbr.rel target = $region41
              $region46: #{custom-call.44} parent=38 // loop_exit
                _
            $region39: #{custom-call.44} parent=23 // pred_fallthru
              _
          $region24: #{custom-call.44} parent=19 // pred_fallthru
            _
          // Predicated region
          $region25: #{custom-call.44} parent=19 // pred_check
            _
          $region26: #{custom-call.44} parent=19 // pred_check_branch
            %62 = sbr.rel (0) target = $region28
          $region27: #{custom-call.44} parent=19 // pred_region
            %s64 = ssub.s32 16, 1
            loop: start=0, step=1, limit=1
            $region29: #{custom-call.44} parent=27 // loop_pre_header
              _
            $region30: #{custom-call.44} parent=27 // loop_header
              %s66 = sphi 0, %s70
              %p67 = scmp.ge.s32.totalorder %s66, 1
              %s71 = sphi %s56, %s56
              %s72 = sphi %s51, %s51
            $region31: #{custom-call.44} parent=27 // loop_header_branch
              %69 = sbr.rel (%p67) target = $region35
            $region32: #{custom-call.44} parent=27 // loop_body
              %v73 = vld [vmem:[%s71] sm:%s64]
              %74 = vst [vmem:[%s72] sm:%s64] %v73
            $region33: #{custom-call.44} parent=27 // loop_footer
              %s70 = sadd.s32 1, %s66
            $region34: #{custom-call.44} parent=27 // loop_footer_branch
              %65 = sbr.rel target = $region30
            $region35: #{custom-call.44} parent=27 // loop_exit
              _
          $region28: #{custom-call.44} parent=19 // pred_fallthru
            _
        $region20: #{custom-call.44} parent=15 // pred_fallthru
          _
        %89 = vnop
      $region16: #{custom-call.44} parent=5 // pred_fallthru
        _
      %p90 = scmp.le.s32.totalorder 1, %s3
      %p91 = scmp.lt.s32.totalorder %s3, 3
      %p92 = pnand %p90, %p91
      %p93 = pneg %p92
      // Predicated region
      $region47: #{custom-call.44} parent=5 // pred_check
        _
      $region48: #{custom-call.44} parent=5 // pred_check_branch
        %95 = sbr.rel (%p92) target = $region50
      $region49: #{custom-call.44} parent=5 // pred_region
        #allocation4 [shape = 'f32[4,4]{1,0}', space=vmem, size = 0x1000, scoped, tag = 'rescaled input a']
        %s96 = ssub.s32 %s3, 1
        %s97 = sand.u32 %s8, 1
        %s98 = sand.u32 %s8, 1
        %s99 = smul.addr %s98, 4
        %s100 = scalar_lea.vmem [#allocation1], %s99
        %s101 = sand.u32 %s8, 1
        %s102 = sand.u32 %s8, 1
        %s103 = smul.addr %s102, 4
        %s104 = scalar_lea.vmem [#allocation1], %s103
        %s105 = sand.u32 %s8, 1
        %s106 = sand.u32 %s8, 1
        %s107 = smul.addr %s106, 4
        %s108 = scalar_lea.vmem [#allocation3], %s107
        %s110 = sshll.u32 1, 4
        %s111 = ssub.s32 %s110, 1
        %v112 = vld [vmem:[%s104] sm:%s111]
        %113 = vst [vmem:[#allocation0] sm:%s111] %v112
        %v114 = vlaneseq
        %v115 = vand.u32 %v114, 127
        %vm116 = vcmp.lt.s32.totalorder %v115, 4
        %v117 = vlaneseq
        %v118 = vshrl.u32 %v117, 7
        %vm120 = vcmp.eq.s32.totalorder %v118, %v115
        %v121 = vld [vmem:[#allocation0] sm:$0xff]
        %v122 = vsel %vm120, %v121, 0.0
        %123 = vadd.xlane.f32.xlu0 %v122
        %v124 = vpop.xlane.xlu0 %123
        %vm125 = vcmp.ge.s32.totalorder %v118, %v115
        %vm126 = vmand %vm125, %vm116
        %v127 = vsel %vm126, %v121, 0.0
        %v128 = vrcp.pop %v124
        %v129 = vmul.f32 %v127, %v128
        %130 = vst [vmem:[#allocation4] sm:$0xff] %v129
        %v131 = vlaneseq
        %v132 = vand.u32 %v131, 127
        %v133 = vlaneseq
        %v134 = vshrl.u32 %v133, 7
        %vm136 = vcmp.eq.s32.totalorder %v132, %v134
        %v137 = vlaneseq
        %v138 = vand.u32 %v137, 127
        %vm139 = vcmp.eq.s32.totalorder %v138, 0
        %v140 = vsel %vm139, 1.0, -1.0
        %v141 = vsel %vm136, %v140, 0.0
        %s142 = scalar_lea.vmem [#allocation4], 1
        %v143 = vld [vmem:[%s142] ss:$0 sm:$0xff]
        %v144 = vxor.u32 %v143, 2147483648
        %v145 = vlaneseq
        %v146 = vand.u32 %v145, 127
        %vm147 = vcmp.eq.s32.totalorder %v146, 1
        %v148 = vmul.f32 %v144, %v141
        %149 = vadd.xlane.f32.xlu0 %v148
        %v150 = vpop.xlane.xlu0 %149
        %v151 = vsel %vm147, %v150, %v141
        %s152 = scalar_lea.vmem [#allocation4], 2
        %v153 = vld [vmem:[%s152] ss:$0 sm:$0xff]
        %v154 = vxor.u32 %v153, 2147483648
        %v155 = vlaneseq
        %v156 = vand.u32 %v155, 127
        %vm157 = vcmp.eq.s32.totalorder %v156, 2
        %v158 = vmul.f32 %v154, %v151
        %159 = vadd.xlane.f32.xlu0 %v158
        %v160 = vpop.xlane.xlu0 %159
        %v161 = vsel %vm157, %v160, %v151
        %s162 = scalar_lea.vmem [#allocation4], 3
        %v163 = vld [vmem:[%s162] ss:$0 sm:$0xff]
        %v164 = vxor.u32 %v163, 2147483648
        %v165 = vlaneseq
        %v166 = vand.u32 %v165, 127
        %vm167 = vcmp.eq.s32.totalorder %v166, 3
        %v168 = vmul.f32 %v164, %v161
        %169 = vadd.xlane.f32.xlu0 %v168
        %v170 = vpop.xlane.xlu0 %169
        %v171 = vsel %vm167, %v170, %v161
        %v172 = vrcp.pop %v124
        %v173 = vmul.f32 %v171, %v172
        %vm174 = vweird.f32 %v124
        %v175 = vsel %vm174, %v171, %v173
        %176 = vst [vmem:[#allocation2] sm:$0xff] %v175
        %s178 = sshll.u32 1, 4
        %s179 = ssub.s32 %s178, 1
        %v181 = vld [vmem:[#allocation2] sm:%s179]
        %s182 = sshll.u32 1, 4
        %s183 = ssub.s32 %s182, 1
        %184 = vst [vmem:[%s108] sm:%s183] %v181
        %s185 = sand.u32 %s8, 1
        %s186 = sand.u32 %s8, 1
        %s187 = smul.addr %s186, 4
        %s188 = scalar_lea.vmem [#allocation3], %s187
        %s189 = sadd.s32 %s17, %s16
        %s190 = sadd.s32 %s189, %s15
        %s191 = sadd.s32 %s190, %s14
        %s192 = smul.addr %s191, 4
        %s193 = scalar_lea.vmem %s1, %s192
        // Predicated region
        $region51: #{custom-call.44} parent=49 // pred_check
          _
        $region52: #{custom-call.44} parent=49 // pred_check_branch
          %195 = sbr.rel (0) target = $region54
        $region53: #{custom-call.44} parent=49 // pred_region
          // Predicated region
          $region55: #{custom-call.44} parent=53 // pred_check
            _
          $region56: #{custom-call.44} parent=53 // pred_check_branch
            %197 = sbr.rel target = $region58
          $region57: #{custom-call.44} parent=53 // pred_region
            // Predicated region
            $region70: #{custom-call.44} parent=57 // pred_check
              _
            $region71: #{custom-call.44} parent=57 // pred_check_branch
              %213 = sbr.rel (0) target = $region73
            $region72: #{custom-call.44} parent=57 // pred_region
              %s215 = ssub.s32 16, 1
              loop: start=0, step=1, limit=1
              $region74: #{custom-call.44} parent=72 // loop_pre_header
                _
              $region75: #{custom-call.44} parent=72 // loop_header
                %s217 = sphi 0, %s221
                %p218 = scmp.ge.s32.totalorder %s217, 1
                %s222 = sphi %s188, %s188
                %s223 = sphi %s193, %s193
              $region76: #{custom-call.44} parent=72 // loop_header_branch
                %220 = sbr.rel (%p218) target = $region80
              $region77: #{custom-call.44} parent=72 // loop_body
                %v224 = vld [vmem:[%s222] sm:%s215]
                %225 = vst [vmem:[%s223] sm:%s215] %v224
              $region78: #{custom-call.44} parent=72 // loop_footer
                %s221 = sadd.s32 1, %s217
              $region79: #{custom-call.44} parent=72 // loop_footer_branch
                %216 = sbr.rel target = $region75
              $region80: #{custom-call.44} parent=72 // loop_exit
                _
            $region73: #{custom-call.44} parent=57 // pred_fallthru
              _
          $region58: #{custom-call.44} parent=53 // pred_fallthru
            _
          // Predicated region
          $region59: #{custom-call.44} parent=53 // pred_check
            _
          $region60: #{custom-call.44} parent=53 // pred_check_branch
            %199 = sbr.rel (0) target = $region62
          $region61: #{custom-call.44} parent=53 // pred_region
            %s201 = ssub.s32 16, 1
            loop: start=0, step=1, limit=1
            $region63: #{custom-call.44} parent=61 // loop_pre_header
              _
            $region64: #{custom-call.44} parent=61 // loop_header
              %s203 = sphi 0, %s207
              %p204 = scmp.ge.s32.totalorder %s203, 1
              %s208 = sphi %s188, %s188
              %s209 = sphi %s193, %s193
            $region65: #{custom-call.44} parent=61 // loop_header_branch
              %206 = sbr.rel (%p204) target = $region69
            $region66: #{custom-call.44} parent=61 // loop_body
              %v210 = vld [vmem:[%s208] sm:%s201]
              %211 = vst [vmem:[%s209] sm:%s201] %v210
            $region67: #{custom-call.44} parent=61 // loop_footer
              %s207 = sadd.s32 1, %s203
            $region68: #{custom-call.44} parent=61 // loop_footer_branch
              %202 = sbr.rel target = $region64
            $region69: #{custom-call.44} parent=61 // loop_exit
              _
          $region62: #{custom-call.44} parent=53 // pred_fallthru
            _
        $region54: #{custom-call.44} parent=49 // pred_fallthru
          _
        %226 = vnop
      $region50: #{custom-call.44} parent=5 // pred_fallthru
        _
      %p227 = scmp.le.s32.totalorder 2, %s3
      // Predicated region
      $region81: #{custom-call.44} parent=5 // pred_check
        %p228 = pneg %p227
      $region82: #{custom-call.44} parent=5 // pred_check_branch
        %230 = sbr.rel (%p228) target = $region84
      $region83: #{custom-call.44} parent=5 // pred_region
        %s231 = ssub.s32 %s3, 2
        %s232 = sand.u32 %s9, 1
        %s233 = sand.u32 %s9, 1
        %s234 = smul.addr %s233, 4
        %s235 = scalar_lea.vmem [#allocation3], %s234
      $region84: #{custom-call.44} parent=5 // pred_fallthru
        _
    $region6: #{custom-call.44} parent=1 // loop_footer
      %s7 = sadd.s32 1, %s3
    $region7: #{custom-call.44} parent=1 // loop_footer_branch
      %2 = sbr.rel target = $region3
    $region8: #{custom-call.44} parent=1 // loop_exit
      _

// kernel: custom-call.43
$region0: #{custom-call.43}
  %s0 = inlined_call_operand.vmem [shape: f32[2,1,4,4], index: 0, kind: input, shape index: {}]
  %s1 = inlined_call_operand.vmem [shape: f32[2,1,4,4], index: 1, kind: output, shape index: {}]
  $region1: #{custom-call.43} parent=0
    #allocation0 [shape = 'u8[4096]{0}', space=vmem, size = 0x1000, scoped, tag = 'operand span for operand 0']
    #allocation1 [shape = 'u8[4096]{0}', space=vmem, size = 0x1000, scoped, tag = 'packed  for operand 0']
    #allocation2 [shape = 'u8[4096]{0}', space=vmem, size = 0x1000, scoped, tag = 'operand span for operand 1']
    #allocation3 [shape = 'u8[4096]{0}', space=vmem, size = 0x1000, scoped, tag = 'packed  for operand 1']
    loop: start=0, step=1, limit=4
    $region2: #{custom-call.43} parent=1 // loop_pre_header
      _
    $region3: #{custom-call.43} parent=1 // loop_header
      %s3 = sphi 0, %s7
      %p4 = scmp.ge.s32.totalorder %s3, 4
      %s10 = sphi 0, %s36
      %s11 = sphi 0, %s32
      %s12 = sphi 0, %s28
      %s13 = sphi 0, %s24
      %s14 = sphi 0, %s10
      %s15 = sphi 0, %s11
      %s16 = sphi 0, %s12
      %s17 = sphi 0, %s13
      %s18 = sphi 0, %s14
      %s19 = sphi 0, %s15
      %s20 = sphi 0, %s16
      %s21 = sphi 0, %s17
    $region4: #{custom-call.43} parent=1 // loop_header_branch
      %6 = sbr.rel (%p4) target = $region8
    $region5: #{custom-call.43} parent=1 // loop_body
      %s8 = ssub.s32 %s3, 1
      %s9 = ssub.s32 %s3, 2
      %s22 = sadd.s32 1, %s13
      %p23 = scmp.ge.s32.totalorder %s22, 1
      %s24 = scalar_select %p23, 0, %s22
      %s25 = sadd.s32 1, %s12
      %s26 = scalar_select %p23, %s25, %s12
      %p27 = scmp.ge.s32.totalorder %s26, 1
      %s28 = scalar_select %p27, 0, %s26
      %s29 = sadd.s32 1, %s11
      %s30 = scalar_select %p27, %s29, %s11
      %p31 = scmp.ge.s32.totalorder %s30, 1
      %s32 = scalar_select %p31, 0, %s30
      %s33 = sadd.s32 1, %s10
      %s34 = scalar_select %p31, %s33, %s10
      %p35 = scmp.ge.s32.totalorder %s34, 2
      %s36 = scalar_select %p35, 0, %s34
      %p37 = scmp.le.s32.totalorder 1, %s3
      %p38 = scmp.lt.s32.totalorder %s3, 3
      %p39 = pnand %p37, %p38
      %p40 = pneg %p39
      // Predicated region
      $region9: #{custom-call.43} parent=5 // pred_check
        _
      $region10: #{custom-call.43} parent=5 // pred_check_branch
        %42 = sbr.rel (%p39) target = $region12
      $region11: #{custom-call.43} parent=5 // pred_region
        %s43 = ssub.s32 %s3, 1
      $region12: #{custom-call.43} parent=5 // pred_fallthru
        _
      %p44 = scmp.lt.s32.totalorder %s3, 2
      // Predicated region
      $region13: #{custom-call.43} parent=5 // pred_check
        %p45 = pneg %p44
      $region14: #{custom-call.43} parent=5 // pred_check_branch
        %47 = sbr.rel (%p45) target = $region16
      $region15: #{custom-call.43} parent=5 // pred_region
        %s48 = sand.u32 %s3, 1
        %s49 = sand.u32 %s3, 1
        %s50 = smul.addr %s49, 4
        %s51 = scalar_lea.vmem [#allocation1], %s50
        %s52 = sadd.s32 %s13, %s12
        %s53 = sadd.s32 %s52, %s11
        %s54 = sadd.s32 %s53, %s10
        %s55 = smul.addr %s54, 4
        %s56 = scalar_lea.vmem %s0, %s55
        // Predicated region
        $region17: #{custom-call.43} parent=15 // pred_check
          _
        $region18: #{custom-call.43} parent=15 // pred_check_branch
          %58 = sbr.rel (0) target = $region20
        $region19: #{custom-call.43} parent=15 // pred_region
          // Predicated region
          $region21: #{custom-call.43} parent=19 // pred_check
            _
          $region22: #{custom-call.43} parent=19 // pred_check_branch
            %60 = sbr.rel target = $region24
          $region23: #{custom-call.43} parent=19 // pred_region
            // Predicated region
            $region36: #{custom-call.43} parent=23 // pred_check
              _
            $region37: #{custom-call.43} parent=23 // pred_check_branch
              %76 = sbr.rel (0) target = $region39
            $region38: #{custom-call.43} parent=23 // pred_region
              %s78 = ssub.s32 16, 1
              loop: start=0, step=1, limit=1
              $region40: #{custom-call.43} parent=38 // loop_pre_header
                _
              $region41: #{custom-call.43} parent=38 // loop_header
                %s80 = sphi 0, %s84
                %p81 = scmp.ge.s32.totalorder %s80, 1
                %s85 = sphi %s56, %s56
                %s86 = sphi %s51, %s51
              $region42: #{custom-call.43} parent=38 // loop_header_branch
                %83 = sbr.rel (%p81) target = $region46
              $region43: #{custom-call.43} parent=38 // loop_body
                %v87 = vld [vmem:[%s85] sm:%s78]
                %88 = vst [vmem:[%s86] sm:%s78] %v87
              $region44: #{custom-call.43} parent=38 // loop_footer
                %s84 = sadd.s32 1, %s80
              $region45: #{custom-call.43} parent=38 // loop_footer_branch
                %79 = sbr.rel target = $region41
              $region46: #{custom-call.43} parent=38 // loop_exit
                _
            $region39: #{custom-call.43} parent=23 // pred_fallthru
              _
          $region24: #{custom-call.43} parent=19 // pred_fallthru
            _
          // Predicated region
          $region25: #{custom-call.43} parent=19 // pred_check
            _
          $region26: #{custom-call.43} parent=19 // pred_check_branch
            %62 = sbr.rel (0) target = $region28
          $region27: #{custom-call.43} parent=19 // pred_region
            %s64 = ssub.s32 16, 1
            loop: start=0, step=1, limit=1
            $region29: #{custom-call.43} parent=27 // loop_pre_header
              _
            $region30: #{custom-call.43} parent=27 // loop_header
              %s66 = sphi 0, %s70
              %p67 = scmp.ge.s32.totalorder %s66, 1
              %s71 = sphi %s56, %s56
              %s72 = sphi %s51, %s51
            $region31: #{custom-call.43} parent=27 // loop_header_branch
              %69 = sbr.rel (%p67) target = $region35
            $region32: #{custom-call.43} parent=27 // loop_body
              %v73 = vld [vmem:[%s71] sm:%s64]
              %74 = vst [vmem:[%s72] sm:%s64] %v73
            $region33: #{custom-call.43} parent=27 // loop_footer
              %s70 = sadd.s32 1, %s66
            $region34: #{custom-call.43} parent=27 // loop_footer_branch
              %65 = sbr.rel target = $region30
            $region35: #{custom-call.43} parent=27 // loop_exit
              _
          $region28: #{custom-call.43} parent=19 // pred_fallthru
            _
        $region20: #{custom-call.43} parent=15 // pred_fallthru
          _
        %89 = vnop
      $region16: #{custom-call.43} parent=5 // pred_fallthru
        _
      %p90 = scmp.le.s32.totalorder 1, %s3
      %p91 = scmp.lt.s32.totalorder %s3, 3
      %p92 = pnand %p90, %p91
      %p93 = pneg %p92
      // Predicated region
      $region47: #{custom-call.43} parent=5 // pred_check
        _
      $region48: #{custom-call.43} parent=5 // pred_check_branch
        %95 = sbr.rel (%p92) target = $region50
      $region49: #{custom-call.43} parent=5 // pred_region
        #allocation4 [shape = 'f32[4,4]{1,0}', space=vmem, size = 0x1000, scoped, tag = 'rescaled input a']
        %s96 = ssub.s32 %s3, 1
        %s97 = sand.u32 %s8, 1
        %s98 = sand.u32 %s8, 1
        %s99 = smul.addr %s98, 4
        %s100 = scalar_lea.vmem [#allocation1], %s99
        %s101 = sand.u32 %s8, 1
        %s102 = sand.u32 %s8, 1
        %s103 = smul.addr %s102, 4
        %s104 = scalar_lea.vmem [#allocation1], %s103
        %s105 = sand.u32 %s8, 1
        %s106 = sand.u32 %s8, 1
        %s107 = smul.addr %s106, 4
        %s108 = scalar_lea.vmem [#allocation3], %s107
        %s110 = sshll.u32 1, 4
        %s111 = ssub.s32 %s110, 1
        %v112 = vld [vmem:[%s104] sm:%s111]
        %113 = vst [vmem:[#allocation0] sm:%s111] %v112
        %v114 = vlaneseq
        %v115 = vand.u32 %v114, 127
        %vm116 = vcmp.lt.s32.totalorder %v115, 4
        %v117 = vlaneseq
        %v118 = vshrl.u32 %v117, 7
        %vm120 = vcmp.eq.s32.totalorder %v118, %v115
        %v121 = vld [vmem:[#allocation0] sm:$0xff]
        %v122 = vsel %vm120, %v121, 0.0
        %123 = vadd.xlane.f32.xlu0 %v122
        %v124 = vpop.xlane.xlu0 %123
        %vm125 = vcmp.le.s32.totalorder %v118, %v115
        %vm126 = vmand %vm125, %vm116
        %v127 = vsel %vm126, %v121, 0.0
        %v128 = vrcp.pop %v124
        %v129 = vmul.f32 %v127, %v128
        %130 = vst [vmem:[#allocation4] sm:$0xff] %v129
        %v131 = vlaneseq
        %v132 = vand.u32 %v131, 127
        %v133 = vlaneseq
        %v134 = vshrl.u32 %v133, 7
        %vm136 = vcmp.eq.s32.totalorder %v132, %v134
        %v137 = vlaneseq
        %v138 = vand.u32 %v137, 127
        %vm139 = vcmp.eq.s32.totalorder %v138, 3
        %v140 = vsel %vm139, 1.0, -1.0
        %v141 = vsel %vm136, %v140, 0.0
        %s142 = scalar_lea.vmem [#allocation4], 2
        %v143 = vld [vmem:[%s142] ss:$0 sm:$0xff]
        %v144 = vxor.u32 %v143, 2147483648
        %v145 = vlaneseq
        %v146 = vand.u32 %v145, 127
        %vm147 = vcmp.eq.s32.totalorder %v146, 2
        %v148 = vmul.f32 %v144, %v141
        %149 = vadd.xlane.f32.xlu0 %v148
        %v150 = vpop.xlane.xlu0 %149
        %v151 = vsel %vm147, %v150, %v141
        %s152 = scalar_lea.vmem [#allocation4], 1
        %v153 = vld [vmem:[%s152] ss:$0 sm:$0xff]
        %v154 = vxor.u32 %v153, 2147483648
        %v155 = vlaneseq
        %v156 = vand.u32 %v155, 127
        %vm157 = vcmp.eq.s32.totalorder %v156, 1
        %v158 = vmul.f32 %v154, %v151
        %159 = vadd.xlane.f32.xlu0 %v158
        %v160 = vpop.xlane.xlu0 %159
        %v161 = vsel %vm157, %v160, %v151
        %v162 = vld [vmem:[#allocation4] ss:$0 sm:$0xff]
        %v163 = vxor.u32 %v162, 2147483648
        %v164 = vlaneseq
        %v165 = vand.u32 %v164, 127
        %vm166 = vcmp.eq.s32.totalorder %v165, 0
        %v167 = vmul.f32 %v163, %v161
        %168 = vadd.xlane.f32.xlu0 %v167
        %v169 = vpop.xlane.xlu0 %168
        %v170 = vsel %vm166, %v169, %v161
        %v171 = vrcp.pop %v124
        %v172 = vmul.f32 %v170, %v171
        %vm173 = vweird.f32 %v124
        %v174 = vsel %vm173, %v170, %v172
        %175 = vst [vmem:[#allocation2] sm:$0xff] %v174
        %s177 = sshll.u32 1, 4
        %s178 = ssub.s32 %s177, 1
        %v180 = vld [vmem:[#allocation2] sm:%s178]
        %s181 = sshll.u32 1, 4
        %s182 = ssub.s32 %s181, 1
        %183 = vst [vmem:[%s108] sm:%s182] %v180
        %s184 = sand.u32 %s8, 1
        %s185 = sand.u32 %s8, 1
        %s186 = smul.addr %s185, 4
        %s187 = scalar_lea.vmem [#allocation3], %s186
        %s188 = sadd.s32 %s17, %s16
        %s189 = sadd.s32 %s188, %s15
        %s190 = sadd.s32 %s189, %s14
        %s191 = smul.addr %s190, 4
        %s192 = scalar_lea.vmem %s1, %s191
        // Predicated region
        $region51: #{custom-call.43} parent=49 // pred_check
          _
        $region52: #{custom-call.43} parent=49 // pred_check_branch
          %194 = sbr.rel (0) target = $region54
        $region53: #{custom-call.43} parent=49 // pred_region
          // Predicated region
          $region55: #{custom-call.43} parent=53 // pred_check
            _
          $region56: #{custom-call.43} parent=53 // pred_check_branch
            %196 = sbr.rel target = $region58
          $region57: #{custom-call.43} parent=53 // pred_region
            // Predicated region
            $region70: #{custom-call.43} parent=57 // pred_check
              _
            $region71: #{custom-call.43} parent=57 // pred_check_branch
              %212 = sbr.rel (0) target = $region73
            $region72: #{custom-call.43} parent=57 // pred_region
              %s214 = ssub.s32 16, 1
              loop: start=0, step=1, limit=1
              $region74: #{custom-call.43} parent=72 // loop_pre_header
                _
              $region75: #{custom-call.43} parent=72 // loop_header
                %s216 = sphi 0, %s220
                %p217 = scmp.ge.s32.totalorder %s216, 1
                %s221 = sphi %s187, %s187
                %s222 = sphi %s192, %s192
              $region76: #{custom-call.43} parent=72 // loop_header_branch
                %219 = sbr.rel (%p217) target = $region80
              $region77: #{custom-call.43} parent=72 // loop_body
                %v223 = vld [vmem:[%s221] sm:%s214]
                %224 = vst [vmem:[%s222] sm:%s214] %v223
              $region78: #{custom-call.43} parent=72 // loop_footer
                %s220 = sadd.s32 1, %s216
              $region79: #{custom-call.43} parent=72 // loop_footer_branch
                %215 = sbr.rel target = $region75
              $region80: #{custom-call.43} parent=72 // loop_exit
                _
            $region73: #{custom-call.43} parent=57 // pred_fallthru
              _
          $region58: #{custom-call.43} parent=53 // pred_fallthru
            _
          // Predicated region
          $region59: #{custom-call.43} parent=53 // pred_check
            _
          $region60: #{custom-call.43} parent=53 // pred_check_branch
            %198 = sbr.rel (0) target = $region62
          $region61: #{custom-call.43} parent=53 // pred_region
            %s200 = ssub.s32 16, 1
            loop: start=0, step=1, limit=1
            $region63: #{custom-call.43} parent=61 // loop_pre_header
              _
            $region64: #{custom-call.43} parent=61 // loop_header
              %s202 = sphi 0, %s206
              %p203 = scmp.ge.s32.totalorder %s202, 1
              %s207 = sphi %s187, %s187
              %s208 = sphi %s192, %s192
            $region65: #{custom-call.43} parent=61 // loop_header_branch
              %205 = sbr.rel (%p203) target = $region69
            $region66: #{custom-call.43} parent=61 // loop_body
              %v209 = vld [vmem:[%s207] sm:%s200]
              %210 = vst [vmem:[%s208] sm:%s200] %v209
            $region67: #{custom-call.43} parent=61 // loop_footer
              %s206 = sadd.s32 1, %s202
            $region68: #{custom-call.43} parent=61 // loop_footer_branch
              %201 = sbr.rel target = $region64
            $region69: #{custom-call.43} parent=61 // loop_exit
              _
          $region62: #{custom-call.43} parent=53 // pred_fallthru
            _
        $region54: #{custom-call.43} parent=49 // pred_fallthru
          _
        %225 = vnop
      $region50: #{custom-call.43} parent=5 // pred_fallthru
        _
      %p226 = scmp.le.s32.totalorder 2, %s3
      // Predicated region
      $region81: #{custom-call.43} parent=5 // pred_check
        %p227 = pneg %p226
      $region82: #{custom-call.43} parent=5 // pred_check_branch
        %229 = sbr.rel (%p227) target = $region84
      $region83: #{custom-call.43} parent=5 // pred_region
        %s230 = ssub.s32 %s3, 2
        %s231 = sand.u32 %s9, 1
        %s232 = sand.u32 %s9, 1
        %s233 = smul.addr %s232, 4
        %s234 = scalar_lea.vmem [#allocation3], %s233
      $region84: #{custom-call.43} parent=5 // pred_fallthru
        _
    $region6: #{custom-call.43} parent=1 // loop_footer
      %s7 = sadd.s32 1, %s3
    $region7: #{custom-call.43} parent=1 // loop_footer_branch
      %2 = sbr.rel target = $region3
    $region8: #{custom-call.43} parent=1 // loop_exit
      _

// kernel: custom-call.22
$region0: #{custom-call.22}
  %s0 = inlined_call_operand.vmem [shape: f32[2,8,8], index: 0, kind: input, shape index: {}]
  %s1 = inlined_call_operand.vmem [shape: f32[2,8,8], index: 1, kind: output, shape index: {0}]
  %s2 = inlined_call_operand.hbm [shape: s32[2,8], index: 2, kind: output, shape index: {1}]
  %s3 = inlined_call_operand.vmem [shape: s32[2,8], index: 3, kind: output, shape index: {2}]
  %4 = xla_tuple %s1, %s2, %s3
  $region1: #{custom-call.22} parent=0
    #allocation0 [shape = 'u8[8192]{0}', space=vmem, size = 0x2000, scoped, tag = 'operand span for operand 0']
    #allocation1 [shape = 'u8[8192]{0}', space=vmem, size = 0x2000, scoped, tag = 'operand span for operand 1']
    #allocation2 [shape = 'u8[4096]{0}', space=vmem, size = 0x1000, scoped, tag = 'operand span for operand 2']
    #allocation3 [shape = 'u8[2048]{0}', space=vmem, size = 0x800, scoped, tag = 'packed  for operand 2']
    #allocation4 [shape = 's32[2]{0}', space=sflag, size = 0x8, scoped, tag = 'scoped memory for custom-call.22']
    #allocation5 [shape = 'u8[4096]{0}', space=vmem, size = 0x1000, scoped, tag = 'operand span for operand 3']
    #allocation6 [shape = 'u8[2048]{0}', space=vmem, size = 0x800, scoped, tag = 'packed  for operand 3']
    %5 = vsyncpa [#allocation4], 0
    %s6 = scalar_lea.sflag [#allocation4], 1
    %7 = vsyncpa %s6, 0
    loop: start=0, step=1, limit=4
    $region2: #{custom-call.22} parent=1 // loop_pre_header
      _
    $region3: #{custom-call.22} parent=1 // loop_header
      %s9 = sphi 0, %s13
      %p10 = scmp.ge.s32.totalorder %s9, 4
      %s21 = sphi 0, %s23
      %s24 = sphi 0, %s21
      %s25 = sphi 0, %s24
      %s41 = sphi 0, %s25
      %s49 = sphi 0, %s51
      %s52 = sphi 0, %s49
      %s53 = sphi 0, %s52
      %s69 = sphi 0, %s53
    $region4: #{custom-call.22} parent=1 // loop_header_branch
      %12 = sbr.rel (%p10) target = $region8
    $region5: #{custom-call.22} parent=1 // loop_body
      %s14 = ssub.s32 %s9, 1
      %s15 = ssub.s32 %s9, 2
      %s16 = sadd.s32 %s9, 1
      %s17 = sshrl.u32 %s9, 3
      %s18 = sshrl.u32 %s16, 3
      %s19 = ssub.s32 %s17, %s18
      %p20 = scmp.eq.s32.totalorder %s19, 0
      %s22 = sadd.s32 %s21, 1
      %s23 = scalar_select %p20, %s21, %s22
      %p26 = pneg %p20
      %p27 = scmp.eq.s32.totalorder %s9, 1
      %p28 = por %p26, %p27
      %p29 = scmp.ne.s32.totalorder %s21, %s24
      %p30 = scmp.eq.s32.totalorder %s9, 0
      %p31 = por %p29, %p30
      %p32 = scmp.ne.s32.totalorder %s21, %s24
      %p33 = scmp.eq.s32.totalorder %s14, 1
      %p34 = por %p32, %p33
      %p35 = scmp.ne.s32.totalorder %s24, %s25
      %p36 = scmp.eq.s32.totalorder %s14, 0
      %p37 = por %p35, %p36
      %p38 = scmp.ne.s32.totalorder %s24, %s25
      %p39 = scmp.eq.s32.totalorder %s15, 1
      %p40 = por %p38, %p39
      %p42 = scmp.ne.s32.totalorder %s25, %s41
      %p43 = scmp.eq.s32.totalorder %s15, 0
      %p44 = por %p42, %p43
      %s45 = sshrl.u32 %s9, 3
      %s46 = sshrl.u32 %s16, 3
      %s47 = ssub.s32 %s45, %s46
      %p48 = scmp.eq.s32.totalorder %s47, 0
      %s50 = sadd.s32 %s49, 1
      %s51 = scalar_select %p48, %s49, %s50
      %p54 = pneg %p48
      %p55 = scmp.eq.s32.totalorder %s9, 1
      %p56 = por %p54, %p55
      %p57 = scmp.ne.s32.totalorder %s49, %s52
      %p58 = scmp.eq.s32.totalorder %s9, 0
      %p59 = por %p57, %p58
      %p60 = scmp.ne.s32.totalorder %s49, %s52
      %p61 = scmp.eq.s32.totalorder %s14, 1
      %p62 = por %p60, %p61
      %p63 = scmp.ne.s32.totalorder %s52, %s53
      %p64 = scmp.eq.s32.totalorder %s14, 0
      %p65 = por %p63, %p64
      %p66 = scmp.ne.s32.totalorder %s52, %s53
      %p67 = scmp.eq.s32.totalorder %s15, 1
      %p68 = por %p66, %p67
      %p70 = scmp.ne.s32.totalorder %s53, %s69
      %p71 = scmp.eq.s32.totalorder %s15, 0
      %p72 = por %p70, %p71
      %p73 = scmp.le.s32.totalorder 1, %s9
      %p74 = scmp.lt.s32.totalorder %s9, 3
      %p75 = pnand %p73, %p74
      %p76 = pneg %p75
      // Predicated region
      $region9: #{custom-call.22} parent=5 // pred_check
        _
      $region10: #{custom-call.22} parent=5 // pred_check_branch
        %78 = sbr.rel (%p75) target = $region12
      $region11: #{custom-call.22} parent=5 // pred_region
        %s79 = ssub.s32 %s9, 1
      $region12: #{custom-call.22} parent=5 // pred_fallthru
        _
      %p80 = scmp.lt.s32.totalorder %s9, 2
      // Predicated region
      $region13: #{custom-call.22} parent=5 // pred_check
        %p81 = pneg %p80
      $region14: #{custom-call.22} parent=5 // pred_check_branch
        %83 = sbr.rel (%p81) target = $region16
      $region15: #{custom-call.22} parent=5 // pred_region
        %s84 = sand.u32 %s9, 1
        %s85 = sand.u32 %s9, 1
        %s86 = smul.addr %s85, 8
        %s87 = scalar_lea.vmem [#allocation0], %s86
        %s88 = smul.addr %s9, 8
        %s89 = scalar_lea.vmem %s0, %s88
        // Predicated region
        $region17: #{custom-call.22} parent=15 // pred_check
          _
        $region18: #{custom-call.22} parent=15 // pred_check_branch
          %91 = sbr.rel (0) target = $region20
        $region19: #{custom-call.22} parent=15 // pred_region
          // Predicated region
          $region21: #{custom-call.22} parent=19 // pred_check
            _
          $region22: #{custom-call.22} parent=19 // pred_check_branch
            %93 = sbr.rel (0) target = $region24
          $region23: #{custom-call.22} parent=19 // pred_region
            // Predicated region
            $region36: #{custom-call.22} parent=23 // pred_check
              _
            $region37: #{custom-call.22} parent=23 // pred_check_branch
              %109 = sbr.rel (0) target = $region39
            $region38: #{custom-call.22} parent=23 // pred_region
              loop: start=0, step=1, limit=1
              $region40: #{custom-call.22} parent=38 // loop_pre_header
                _
              $region41: #{custom-call.22} parent=38 // loop_header
                %s111 = sphi 0, %s115
                %p112 = scmp.ge.s32.totalorder %s111, 1
                %s116 = sphi %s89, %s89
                %s117 = sphi %s87, %s87
              $region42: #{custom-call.22} parent=38 // loop_header_branch
                %114 = sbr.rel (%p112) target = $region46
              $region43: #{custom-call.22} parent=38 // loop_body
                %v118 = vld [vmem:[%s116] sm:$0xff]
                %119 = vst [vmem:[%s117] sm:$0xff] %v118
              $region44: #{custom-call.22} parent=38 // loop_footer
                %s115 = sadd.s32 1, %s111
              $region45: #{custom-call.22} parent=38 // loop_footer_branch
                %110 = sbr.rel target = $region41
              $region46: #{custom-call.22} parent=38 // loop_exit
                _
            $region39: #{custom-call.22} parent=23 // pred_fallthru
              _
            // Predicated region
            $region47: #{custom-call.22} parent=23 // pred_check
              _
            $region48: #{custom-call.22} parent=23 // pred_check_branch
              %121 = sbr.rel target = $region50
            $region49: #{custom-call.22} parent=23 // pred_region
              _
            $region50: #{custom-call.22} parent=23 // pred_fallthru
              _
          $region24: #{custom-call.22} parent=19 // pred_fallthru
            _
          // Predicated region
          $region25: #{custom-call.22} parent=19 // pred_check
            _
          $region26: #{custom-call.22} parent=19 // pred_check_branch
            %95 = sbr.rel target = $region28
          $region27: #{custom-call.22} parent=19 // pred_region
            %s97 = ssub.s32 256, 1
            loop: start=0, step=1, limit=1
            $region29: #{custom-call.22} parent=27 // loop_pre_header
              _
            $region30: #{custom-call.22} parent=27 // loop_header
              %s99 = sphi 0, %s103
              %p100 = scmp.ge.s32.totalorder %s99, 1
              %s104 = sphi %s89, %s89
              %s105 = sphi %s87, %s87
            $region31: #{custom-call.22} parent=27 // loop_header_branch
              %102 = sbr.rel (%p100) target = $region35
            $region32: #{custom-call.22} parent=27 // loop_body
              %v106 = vld [vmem:[%s104] sm:%s97]
              %107 = vst [vmem:[%s105] sm:%s97] %v106
            $region33: #{custom-call.22} parent=27 // loop_footer
              %s103 = sadd.s32 1, %s99
            $region34: #{custom-call.22} parent=27 // loop_footer_branch
              %98 = sbr.rel target = $region30
            $region35: #{custom-call.22} parent=27 // loop_exit
              _
          $region28: #{custom-call.22} parent=19 // pred_fallthru
            _
        $region20: #{custom-call.22} parent=15 // pred_fallthru
          _
        %122 = vnop
      $region16: #{custom-call.22} parent=5 // pred_fallthru
        _
      %p123 = scmp.le.s32.totalorder 1, %s9
      %p124 = scmp.lt.s32.totalorder %s9, 3
      %p125 = pnand %p123, %p124
      %p126 = pneg %p125
      // Predicated region
      $region51: #{custom-call.22} parent=5 // pred_check
        _
      $region52: #{custom-call.22} parent=5 // pred_check_branch
        %128 = sbr.rel (%p125) target = $region54
      $region53: #{custom-call.22} parent=5 // pred_region
        #allocation7 [shape = 's32[8,128]{1,0}', space=vmem, size = 0x1000, scoped, tag = 'scratch for permutations']
        %s129 = ssub.s32 %s9, 1
        %s130 = sand.u32 %s14, 1
        %s131 = sand.u32 %s14, 1
        %s132 = smul.addr %s131, 8
        %s133 = scalar_lea.vmem [#allocation0], %s132
        %s134 = sand.u32 %s14, 1
        %s135 = sand.u32 %s14, 1
        %s136 = smul.addr %s135, 8
        %s137 = scalar_lea.vmem [#allocation0], %s136
        %s138 = sand.u32 %s14, 1
        %s139 = sand.u32 %s14, 1
        %s140 = smul.addr %s139, 8
        %s141 = scalar_lea.vmem [#allocation1], %s140
        %p142 = pneg %p37
        %p143 = pneg %p34
        %s144 = sand.u32 %s24, 1
        %s145 = scalar_lea.sflag [#allocation4], %s144
        %s146 = sand.u32 %s24, 1
        %s147 = smul.addr %s146, 2
        %s148 = scalar_lea.vmem [#allocation3], %s147
        %p149 = pneg %p65
        %p150 = pneg %p62
        %s151 = sand.u32 %s52, 1
        %s152 = sand.u32 %s52, 1
        %s153 = smul.addr %s152, 2
        %s154 = scalar_lea.vmem [#allocation6], %s153
        %s155 = sshrl.u32 %s14, 3
        %s156 = sshrl.u32 %s14, 3
        %v157 = vld [vmem:[%s133] sm:$0xff]
        %158 = vst [vmem:[%s141] sm:$0xff] %v157
        %s159 = sand.u32 %s14, 7
        %s160 = scalar_lea.vmem [#allocation2], %s159
        %s161 = sand.u32 %s14, 7
        %s162 = scalar_lea.vmem [#allocation5], %s161
        %163 = vst [vmem:[%s160] sm:$0x1] 0
        %v164 = vlaneseq
        %v165 = vshrl.u32 %v164, 7
        %v166 = vmov %v165
        %168 = vst [vmem:[#allocation7] sm:$0xff] %v166
        loop: start=0, step=1, limit=8
        $region56: #{custom-call.22} parent=53 // loop_pre_header
          _
        $region57: #{custom-call.22} parent=53 // loop_header
          %s170 = sphi 0, %s174
          %p171 = scmp.ge.s32.totalorder %s170, 8
        $region58: #{custom-call.22} parent=53 // loop_header_branch
          %173 = sbr.rel (%p171) target = $region62
        $region59: #{custom-call.22} parent=53 // loop_body
          %v175 = vstv %s170
          %v176 = vlaneseq
          %v177 = vshrl.u32 %v176, 7
          %v178 = vmov %v177
          %v179 = vld [vmem:[%s141] sm:$0xff]
          %v180 = vand.u32 2147483647, %v179
          %v182 = vstv %s170
          %vm183 = vcmp.ge.s32.totalorder %v178, %v182
          %vm184 = vcmp.lt.s32.totalorder %v178, 8
          %vm185 = vmand %vm183, %vm184
          %vm186 = vcmp.lt.f32.partialorder -inf, %v180
          %vm187 = vmand %vm185, %vm186
          %v188 = vsel %vm187, %v178, %v175
          %v189 = vsel %vm187, %v180, -inf
          %v190 = vrot.slane %v189, 1
          %v191 = vrot.slane %v188, 1
          %vm192 = vcmp.ge.f32.partialorder %v190, %v189
          %v193 = vsel %vm192, %v190, %v189
          %v194 = vsel %vm192, %v191, %v188
          %v195 = vrot.slane %v190, 1
          %v196 = vrot.slane %v191, 1
          %vm197 = vcmp.ge.f32.partialorder %v195, %v193
          %v198 = vsel %vm197, %v195, %v193
          %v199 = vsel %vm197, %v196, %v194
          %v200 = vrot.slane %v195, 1
          %v201 = vrot.slane %v196, 1
          %vm202 = vcmp.ge.f32.partialorder %v200, %v198
          %v203 = vsel %vm202, %v200, %v198
          %v204 = vsel %vm202, %v201, %v199
          %v205 = vrot.slane %v200, 1
          %v206 = vrot.slane %v201, 1
          %vm207 = vcmp.ge.f32.partialorder %v205, %v203
          %v208 = vsel %vm207, %v205, %v203
          %v209 = vsel %vm207, %v206, %v204
          %v210 = vrot.slane %v205, 1
          %v211 = vrot.slane %v206, 1
          %vm212 = vcmp.ge.f32.partialorder %v210, %v208
          %v213 = vsel %vm212, %v210, %v208
          %v214 = vsel %vm212, %v211, %v209
          %v215 = vrot.slane %v210, 1
          %v216 = vrot.slane %v211, 1
          %vm217 = vcmp.ge.f32.partialorder %v215, %v213
          %v218 = vsel %vm217, %v215, %v213
          %v219 = vsel %vm217, %v216, %v214
          %v220 = vrot.slane %v215, 1
          %v221 = vrot.slane %v216, 1
          %vm222 = vcmp.ge.f32.partialorder %v220, %v218
          %v223 = vsel %vm222, %v220, %v218
          %v224 = vsel %vm222, %v221, %v219
          %s225 = ssub.s32 128, %s170
          %226 = vrot.lane.b32.xlu0 %v224, %s225
          %v227 = vpop.permute.xlu0 %226
          %s228 = vtos %v227
          %v229 = vstv %s170
          %v230 = vlaneseq
          %v231 = vand.u32 %v230, 127
          %vm232 = vcmp.eq.s32.totalorder %v231, %v229
          %v233 = vstv %s228
          %v234 = vld [vmem:[%s160] ss:$0 sm:$0xff]
          %v235 = vsel %vm232, %v233, %v234
          %236 = vst [vmem:[%s160] sm:$0x1] %v235
          %s237 = scalar_lea.vmem %s141, %s170 [#allocation1]
          %s238 = scalar_lea.vmem %s141, %s228 [#allocation1]
          %v239 = vld [vmem:[%s237] ss:$0 sm:$0xff]
          %v240 = vld [vmem:[%s238] ss:$0 sm:$0xff]
          %241 = vst [vmem:[%s238] sm:$0x1] %v239
          %242 = vst [vmem:[%s237] sm:$0x1] %v240
          %s243 = scalar_lea.vmem [#allocation7], %s170
          %s244 = scalar_lea.vmem [#allocation7], %s228
          %v245 = vld [vmem:[%s243] ss:$0 sm:$0xff]
          %v246 = vld [vmem:[%s244] ss:$0 sm:$0xff]
          %247 = vst [vmem:[%s244] sm:$0x1] %v245
          %248 = vst [vmem:[%s243] sm:$0x1] %v246
          %vm249 = vcmp.ne.f32.partialorder %v240, 0.0
          %vm250 = vmand %vm232, %vm249
          %v251 = vsel %vm250, %v240, 1.0
          %v252 = vlaneseq
          %v253 = vand.u32 %v252, 127
          %v254 = vstv %s170
          %vm255 = vcmp.gt.s32.totalorder %v253, %v254
          %v256 = vsel %vm255, %v240, 0.0
          %v257 = vlaneseq
          %v258 = vshrl.u32 %v257, 7
          %v259 = vmov %v258
          %v260 = vld [vmem:[%s141] sm:$0xff]
          %v262 = vstv %s170
          %vm263 = vcmp.gt.s32.totalorder %v259, %v262
          %v264 = vsel %vm263, %v251, 1.0
          %v265 = vrcp.pop %v264
          %v266 = vmul.f32 %v260, %v265
          %vm267 = vmand %vm263, %vm232
          %v268 = vsel %vm267, %v266, 0.0
          %269 = vadd.xlane.f32.xlu0 %v268
          %v270 = vpop.xlane.xlu0 %269
          %v271 = vmul.f32 %v270, %v256
          %v272 = vsub.f32 %v266, %v271
          %273 = vst [vmem:[%s141] sm:$0xff] %v272
        $region60: #{custom-call.22} parent=53 // loop_footer
          %s174 = sadd.s32 1, %s170
        $region61: #{custom-call.22} parent=53 // loop_footer_branch
          %169 = sbr.rel target = $region57
        $region62: #{custom-call.22} parent=53 // loop_exit
          _
        %v274 = vld [vmem:[#allocation7] sm:$0xff]
        %s275 = scalar_lea.vmem [#allocation7], 8
        %s276 = scalar_lea.vmem [#allocation7], 16
        %s277 = scalar_lea.vmem [#allocation7], 24
        %s278 = scalar_lea.vmem [#allocation7], 32
        %s279 = scalar_lea.vmem [#allocation7], 40
        %s280 = scalar_lea.vmem [#allocation7], 48
        %s281 = scalar_lea.vmem [#allocation7], 56
        %s282 = scalar_lea.vmem [#allocation7], 64
        %s283 = scalar_lea.vmem [#allocation7], 72
        %s284 = scalar_lea.vmem [#allocation7], 80
        %s285 = scalar_lea.vmem [#allocation7], 88
        %s286 = scalar_lea.vmem [#allocation7], 96
        %s287 = scalar_lea.vmem [#allocation7], 104
        %s288 = scalar_lea.vmem [#allocation7], 112
        %s289 = scalar_lea.vmem [#allocation7], 120
        %290 = vxpose.xlu0.b32.start [1/16] %v274, 128
        %291 = vxpose.xlu0.b32.cont [2/16] 0, 128
        %292 = vxpose.xlu0.b32.cont [3/16] 0, 128
        %293 = vxpose.xlu0.b32.cont [4/16] 0, 128
        %294 = vxpose.xlu0.b32.cont [5/16] 0, 128
        %295 = vxpose.xlu0.b32.cont [6/16] 0, 128
        %296 = vxpose.xlu0.b32.cont [7/16] 0, 128
        %297 = vxpose.xlu0.b32.cont [8/16] 0, 128
        %298 = vxpose.xlu0.b32.cont [9/16] 0, 128
        %299 = vxpose.xlu0.b32.cont [10/16] 0, 128
        %300 = vxpose.xlu0.b32.cont [11/16] 0, 128
        %301 = vxpose.xlu0.b32.cont [12/16] 0, 128
        %302 = vxpose.xlu0.b32.cont [13/16] 0, 128
        %303 = vxpose.xlu0.b32.cont [14/16] 0, 128
        %304 = vxpose.xlu0.b32.cont [15/16] 0, 128
        %305 = vxpose.xlu0.b32.end [16/16] 0, 128
        %v306 = vpop.trf.xlu0
        %v307 = vpop.trf.xlu0
        %v308 = vpop.trf.xlu0
        %v309 = vpop.trf.xlu0
        %v310 = vpop.trf.xlu0
        %v311 = vpop.trf.xlu0
        %v312 = vpop.trf.xlu0
        %v313 = vpop.trf.xlu0
        %v314 = vpop.trf.xlu0
        %v315 = vpop.trf.xlu0
        %v316 = vpop.trf.xlu0
        %v317 = vpop.trf.xlu0
        %v318 = vpop.trf.xlu0
        %v319 = vpop.trf.xlu0
        %v320 = vpop.trf.xlu0
        %v321 = vpop.trf.xlu0
        %322 = vst [vmem:[%s162] sm:$0x1] %v306
        %s324 = sshll.u32 1, 2
        %s325 = ssub.s32 %s324, 1
        %v327 = vld [vmem:[#allocation2] sm:%s325]
        %s328 = sshll.u32 1, 2
        %s329 = ssub.s32 %s328, 1
        %330 = vst [vmem:[%s148] sm:%s329] %v327
        %s332 = sshll.u32 1, 2
        %s333 = ssub.s32 %s332, 1
        %v335 = vld [vmem:[#allocation5] sm:%s333]
        %s336 = sshll.u32 1, 2
        %s337 = ssub.s32 %s336, 1
        %338 = vst [vmem:[%s154] sm:%s337] %v335
        %s339 = sand.u32 %s14, 1
        %s340 = sand.u32 %s14, 1
        %s341 = smul.addr %s340, 8
        %s342 = scalar_lea.vmem [#allocation1], %s341
        %s343 = sand.u32 %s24, 1
        %s344 = scalar_lea.sflag [#allocation4], %s343
        %s345 = sand.u32 %s24, 1
        %s346 = smul.addr %s345, 2
        %s347 = scalar_lea.vmem [#allocation3], %s346
        %s348 = sand.u32 %s52, 1
        %s349 = sand.u32 %s52, 1
        %s350 = smul.addr %s349, 2
        %s351 = scalar_lea.vmem [#allocation6], %s350
        %s352 = smul.addr %s14, 8
        %s353 = scalar_lea.vmem %s1, %s352
        // Predicated region
        $region63: #{custom-call.22} parent=53 // pred_check
          _
        $region64: #{custom-call.22} parent=53 // pred_check_branch
          %355 = sbr.rel (0) target = $region66
        $region65: #{custom-call.22} parent=53 // pred_region
          // Predicated region
          $region67: #{custom-call.22} parent=65 // pred_check
            _
          $region68: #{custom-call.22} parent=65 // pred_check_branch
            %357 = sbr.rel (0) target = $region70
          $region69: #{custom-call.22} parent=65 // pred_region
            // Predicated region
            $region82: #{custom-call.22} parent=69 // pred_check
              _
            $region83: #{custom-call.22} parent=69 // pred_check_branch
              %373 = sbr.rel (0) target = $region85
            $region84: #{custom-call.22} parent=69 // pred_region
              loop: start=0, step=1, limit=1
              $region86: #{custom-call.22} parent=84 // loop_pre_header
                _
              $region87: #{custom-call.22} parent=84 // loop_header
                %s375 = sphi 0, %s379
                %p376 = scmp.ge.s32.totalorder %s375, 1
                %s380 = sphi %s342, %s342
                %s381 = sphi %s353, %s353
              $region88: #{custom-call.22} parent=84 // loop_header_branch
                %378 = sbr.rel (%p376) target = $region92
              $region89: #{custom-call.22} parent=84 // loop_body
                %v382 = vld [vmem:[%s380] sm:$0xff]
                %383 = vst [vmem:[%s381] sm:$0xff] %v382
              $region90: #{custom-call.22} parent=84 // loop_footer
                %s379 = sadd.s32 1, %s375
              $region91: #{custom-call.22} parent=84 // loop_footer_branch
                %374 = sbr.rel target = $region87
              $region92: #{custom-call.22} parent=84 // loop_exit
                _
            $region85: #{custom-call.22} parent=69 // pred_fallthru
              _
            // Predicated region
            $region93: #{custom-call.22} parent=69 // pred_check
              _
            $region94: #{custom-call.22} parent=69 // pred_check_branch
              %385 = sbr.rel target = $region96
            $region95: #{custom-call.22} parent=69 // pred_region
              _
            $region96: #{custom-call.22} parent=69 // pred_fallthru
              _
          $region70: #{custom-call.22} parent=65 // pred_fallthru
            _
          // Predicated region
          $region71: #{custom-call.22} parent=65 // pred_check
            _
          $region72: #{custom-call.22} parent=65 // pred_check_branch
            %359 = sbr.rel target = $region74
          $region73: #{custom-call.22} parent=65 // pred_region
            %s361 = ssub.s32 256, 1
            loop: start=0, step=1, limit=1
            $region75: #{custom-call.22} parent=73 // loop_pre_header
              _
            $region76: #{custom-call.22} parent=73 // loop_header
              %s363 = sphi 0, %s367
              %p364 = scmp.ge.s32.totalorder %s363, 1
              %s368 = sphi %s342, %s342
              %s369 = sphi %s353, %s353
            $region77: #{custom-call.22} parent=73 // loop_header_branch
              %366 = sbr.rel (%p364) target = $region81
            $region78: #{custom-call.22} parent=73 // loop_body
              %v370 = vld [vmem:[%s368] sm:%s361]
              %371 = vst [vmem:[%s369] sm:%s361] %v370
            $region79: #{custom-call.22} parent=73 // loop_footer
              %s367 = sadd.s32 1, %s363
            $region80: #{custom-call.22} parent=73 // loop_footer_branch
              %362 = sbr.rel target = $region76
            $region81: #{custom-call.22} parent=73 // loop_exit
              _
          $region74: #{custom-call.22} parent=65 // pred_fallthru
            _
        $region66: #{custom-call.22} parent=53 // pred_fallthru
          _
        %386 = vnop
        // Predicated region
        $region97: #{custom-call.22} parent=53 // pred_check
          %p387 = pneg %p34
        $region98: #{custom-call.22} parent=53 // pred_check_branch
          %389 = sbr.rel (%p387) target = $region100
        $region99: #{custom-call.22} parent=53 // pred_region
          %s390 = sshrl.u32 %s14, 3
          %s392 = ssub.s32 32, 32
          %393 = vsyncadd %s344, %s392
          %s394 = smul.addr %s390, 32
          %s395 = scalar_lea.hbm %s2, %s394
          %s397 = sshll.u32 %s347, 4
          %s398 = int_to_ptr.vmem [resolvable:$true] %s397
          %400 = dma.vmem_to_hbm [thread:$0]  %s398, 32, %s395, %s344
        $region100: #{custom-call.22} parent=53 // pred_fallthru
          _
        // Predicated region
        $region101: #{custom-call.22} parent=53 // pred_check
          %p401 = pneg %p62
        $region102: #{custom-call.22} parent=53 // pred_check_branch
          %403 = sbr.rel (%p401) target = $region104
        $region103: #{custom-call.22} parent=53 // pred_region
          %s404 = sshrl.u32 %s14, 3
          %s405 = smul.addr %s404, 2
          %s406 = scalar_lea.vmem %s3, %s405
          // Predicated region
          $region105: #{custom-call.22} parent=103 // pred_check
            _
          $region106: #{custom-call.22} parent=103 // pred_check_branch
            %408 = sbr.rel (0) target = $region108
          $region107: #{custom-call.22} parent=103 // pred_region
            // Predicated region
            $region109: #{custom-call.22} parent=107 // pred_check
              _
            $region110: #{custom-call.22} parent=107 // pred_check_branch
              %410 = sbr.rel target = $region112
            $region111: #{custom-call.22} parent=107 // pred_region
              // Predicated region
              $region124: #{custom-call.22} parent=111 // pred_check
                _
              $region125: #{custom-call.22} parent=111 // pred_check_branch
                %426 = sbr.rel (0) target = $region127
              $region126: #{custom-call.22} parent=111 // pred_region
                %s428 = ssub.s32 4, 1
                loop: start=0, step=1, limit=1
                $region128: #{custom-call.22} parent=126 // loop_pre_header
                  _
                $region129: #{custom-call.22} parent=126 // loop_header
                  %s430 = sphi 0, %s434
                  %p431 = scmp.ge.s32.totalorder %s430, 1
                  %s435 = sphi %s351, %s351
                  %s436 = sphi %s406, %s406
                $region130: #{custom-call.22} parent=126 // loop_header_branch
                  %433 = sbr.rel (%p431) target = $region134
                $region131: #{custom-call.22} parent=126 // loop_body
                  %v437 = vld [vmem:[%s435] sm:%s428]
                  %438 = vst [vmem:[%s436] sm:%s428] %v437
                $region132: #{custom-call.22} parent=126 // loop_footer
                  %s434 = sadd.s32 1, %s430
                $region133: #{custom-call.22} parent=126 // loop_footer_branch
                  %429 = sbr.rel target = $region129
                $region134: #{custom-call.22} parent=126 // loop_exit
                  _
              $region127: #{custom-call.22} parent=111 // pred_fallthru
                _
            $region112: #{custom-call.22} parent=107 // pred_fallthru
              _
            // Predicated region
            $region113: #{custom-call.22} parent=107 // pred_check
              _
            $region114: #{custom-call.22} parent=107 // pred_check_branch
              %412 = sbr.rel (0) target = $region116
            $region115: #{custom-call.22} parent=107 // pred_region
              %s414 = ssub.s32 4, 1
              loop: start=0, step=1, limit=1
              $region117: #{custom-call.22} parent=115 // loop_pre_header
                _
              $region118: #{custom-call.22} parent=115 // loop_header
                %s416 = sphi 0, %s420
                %p417 = scmp.ge.s32.totalorder %s416, 1
                %s421 = sphi %s351, %s351
                %s422 = sphi %s406, %s406
              $region119: #{custom-call.22} parent=115 // loop_header_branch
                %419 = sbr.rel (%p417) target = $region123
              $region120: #{custom-call.22} parent=115 // loop_body
                %v423 = vld [vmem:[%s421] sm:%s414]
                %424 = vst [vmem:[%s422] sm:%s414] %v423
              $region121: #{custom-call.22} parent=115 // loop_footer
                %s420 = sadd.s32 1, %s416
              $region122: #{custom-call.22} parent=115 // loop_footer_branch
                %415 = sbr.rel target = $region118
              $region123: #{custom-call.22} parent=115 // loop_exit
                _
            $region116: #{custom-call.22} parent=107 // pred_fallthru
              _
          $region108: #{custom-call.22} parent=103 // pred_fallthru
            _
          %439 = vnop
        $region104: #{custom-call.22} parent=53 // pred_fallthru
          _
      $region54: #{custom-call.22} parent=5 // pred_fallthru
        _
      %p440 = scmp.le.s32.totalorder 2, %s9
      // Predicated region
      $region135: #{custom-call.22} parent=5 // pred_check
        %p441 = pneg %p440
      $region136: #{custom-call.22} parent=5 // pred_check_branch
        %443 = sbr.rel (%p441) target = $region138
      $region137: #{custom-call.22} parent=5 // pred_region
        %s444 = ssub.s32 %s9, 2
        %s445 = sand.u32 %s15, 1
        %s446 = sand.u32 %s15, 1
        %s447 = smul.addr %s446, 8
        %s448 = scalar_lea.vmem [#allocation1], %s447
        // Predicated region
        $region139: #{custom-call.22} parent=137 // pred_check
          %p449 = pneg %p40
        $region140: #{custom-call.22} parent=137 // pred_check_branch
          %451 = sbr.rel (%p449) target = $region142
        $region141: #{custom-call.22} parent=137 // pred_region
          %s452 = sand.u32 %s25, 1
          %s453 = scalar_lea.sflag [#allocation4], %s452
          %s454 = sand.u32 %s25, 1
          %s455 = smul.addr %s454, 2
          %s456 = scalar_lea.vmem [#allocation3], %s455
          %457 = dma.done %s453, 32
        $region142: #{custom-call.22} parent=137 // pred_fallthru
          _
        // Predicated region
        $region143: #{custom-call.22} parent=137 // pred_check
          %p458 = pneg %p68
        $region144: #{custom-call.22} parent=137 // pred_check_branch
          %460 = sbr.rel (%p458) target = $region146
        $region145: #{custom-call.22} parent=137 // pred_region
          %s461 = sand.u32 %s53, 1
          %s462 = sand.u32 %s53, 1
          %s463 = smul.addr %s462, 2
          %s464 = scalar_lea.vmem [#allocation6], %s463
        $region146: #{custom-call.22} parent=137 // pred_fallthru
          _
      $region138: #{custom-call.22} parent=5 // pred_fallthru
        _
    $region6: #{custom-call.22} parent=1 // loop_footer
      %s13 = sadd.s32 1, %s9
    $region7: #{custom-call.22} parent=1 // loop_footer_branch
      %8 = sbr.rel target = $region3
    $region8: #{custom-call.22} parent=1 // loop_exit
      _
    %465 = vsyncpa [#allocation4], 1
    %s466 = scalar_lea.sflag [#allocation4], 1
    %467 = vsyncpa %s466, 1

// kernel: custom-call.24
$region0: #{custom-call.24}
  %s0 = inlined_call_operand.vmem [shape: f32[2,1,8,8], index: 0, kind: input, shape index: {}]
  %s1 = inlined_call_operand.vmem [shape: f32[2,1,8,8], index: 1, kind: output, shape index: {}]
  $region1: #{custom-call.24} parent=0
    #allocation0 [shape = 'u8[8192]{0}', space=vmem, size = 0x2000, scoped, tag = 'operand span for operand 0']
    #allocation1 [shape = 'u8[8192]{0}', space=vmem, size = 0x2000, scoped, tag = 'operand span for operand 1']
    loop: start=0, step=1, limit=4
    $region2: #{custom-call.24} parent=1 // loop_pre_header
      _
    $region3: #{custom-call.24} parent=1 // loop_header
      %s3 = sphi 0, %s7
      %p4 = scmp.ge.s32.totalorder %s3, 4
      %s10 = sphi 0, %s36
      %s11 = sphi 0, %s32
      %s12 = sphi 0, %s28
      %s13 = sphi 0, %s24
      %s14 = sphi 0, %s10
      %s15 = sphi 0, %s11
      %s16 = sphi 0, %s12
      %s17 = sphi 0, %s13
      %s18 = sphi 0, %s14
      %s19 = sphi 0, %s15
      %s20 = sphi 0, %s16
      %s21 = sphi 0, %s17
    $region4: #{custom-call.24} parent=1 // loop_header_branch
      %6 = sbr.rel (%p4) target = $region8
    $region5: #{custom-call.24} parent=1 // loop_body
      %s8 = ssub.s32 %s3, 1
      %s9 = ssub.s32 %s3, 2
      %s22 = sadd.s32 1, %s13
      %p23 = scmp.ge.s32.totalorder %s22, 1
      %s24 = scalar_select %p23, 0, %s22
      %s25 = sadd.s32 1, %s12
      %s26 = scalar_select %p23, %s25, %s12
      %p27 = scmp.ge.s32.totalorder %s26, 1
      %s28 = scalar_select %p27, 0, %s26
      %s29 = sadd.s32 1, %s11
      %s30 = scalar_select %p27, %s29, %s11
      %p31 = scmp.ge.s32.totalorder %s30, 1
      %s32 = scalar_select %p31, 0, %s30
      %s33 = sadd.s32 1, %s10
      %s34 = scalar_select %p31, %s33, %s10
      %p35 = scmp.ge.s32.totalorder %s34, 2
      %s36 = scalar_select %p35, 0, %s34
      %p37 = scmp.le.s32.totalorder 1, %s3
      %p38 = scmp.lt.s32.totalorder %s3, 3
      %p39 = pnand %p37, %p38
      %p40 = pneg %p39
      // Predicated region
      $region9: #{custom-call.24} parent=5 // pred_check
        _
      $region10: #{custom-call.24} parent=5 // pred_check_branch
        %42 = sbr.rel (%p39) target = $region12
      $region11: #{custom-call.24} parent=5 // pred_region
        %s43 = ssub.s32 %s3, 1
      $region12: #{custom-call.24} parent=5 // pred_fallthru
        _
      %p44 = scmp.lt.s32.totalorder %s3, 2
      // Predicated region
      $region13: #{custom-call.24} parent=5 // pred_check
        %p45 = pneg %p44
      $region14: #{custom-call.24} parent=5 // pred_check_branch
        %47 = sbr.rel (%p45) target = $region16
      $region15: #{custom-call.24} parent=5 // pred_region
        %s48 = sand.u32 %s3, 1
        %s49 = sand.u32 %s3, 1
        %s50 = smul.addr %s49, 8
        %s51 = scalar_lea.vmem [#allocation0], %s50
        %s52 = sadd.s32 %s13, %s12
        %s53 = sadd.s32 %s52, %s11
        %s54 = sadd.s32 %s53, %s10
        %s55 = smul.addr %s54, 8
        %s56 = scalar_lea.vmem %s0, %s55
        // Predicated region
        $region17: #{custom-call.24} parent=15 // pred_check
          _
        $region18: #{custom-call.24} parent=15 // pred_check_branch
          %58 = sbr.rel (0) target = $region20
        $region19: #{custom-call.24} parent=15 // pred_region
          // Predicated region
          $region21: #{custom-call.24} parent=19 // pred_check
            _
          $region22: #{custom-call.24} parent=19 // pred_check_branch
            %60 = sbr.rel (0) target = $region24
          $region23: #{custom-call.24} parent=19 // pred_region
            // Predicated region
            $region36: #{custom-call.24} parent=23 // pred_check
              _
            $region37: #{custom-call.24} parent=23 // pred_check_branch
              %76 = sbr.rel (0) target = $region39
            $region38: #{custom-call.24} parent=23 // pred_region
              loop: start=0, step=1, limit=1
              $region40: #{custom-call.24} parent=38 // loop_pre_header
                _
              $region41: #{custom-call.24} parent=38 // loop_header
                %s78 = sphi 0, %s82
                %p79 = scmp.ge.s32.totalorder %s78, 1
                %s83 = sphi %s56, %s56
                %s84 = sphi %s51, %s51
              $region42: #{custom-call.24} parent=38 // loop_header_branch
                %81 = sbr.rel (%p79) target = $region46
              $region43: #{custom-call.24} parent=38 // loop_body
                %v85 = vld [vmem:[%s83] sm:$0xff]
                %86 = vst [vmem:[%s84] sm:$0xff] %v85
              $region44: #{custom-call.24} parent=38 // loop_footer
                %s82 = sadd.s32 1, %s78
              $region45: #{custom-call.24} parent=38 // loop_footer_branch
                %77 = sbr.rel target = $region41
              $region46: #{custom-call.24} parent=38 // loop_exit
                _
            $region39: #{custom-call.24} parent=23 // pred_fallthru
              _
            // Predicated region
            $region47: #{custom-call.24} parent=23 // pred_check
              _
            $region48: #{custom-call.24} parent=23 // pred_check_branch
              %88 = sbr.rel target = $region50
            $region49: #{custom-call.24} parent=23 // pred_region
              _
            $region50: #{custom-call.24} parent=23 // pred_fallthru
              _
          $region24: #{custom-call.24} parent=19 // pred_fallthru
            _
          // Predicated region
          $region25: #{custom-call.24} parent=19 // pred_check
            _
          $region26: #{custom-call.24} parent=19 // pred_check_branch
            %62 = sbr.rel target = $region28
          $region27: #{custom-call.24} parent=19 // pred_region
            %s64 = ssub.s32 256, 1
            loop: start=0, step=1, limit=1
            $region29: #{custom-call.24} parent=27 // loop_pre_header
              _
            $region30: #{custom-call.24} parent=27 // loop_header
              %s66 = sphi 0, %s70
              %p67 = scmp.ge.s32.totalorder %s66, 1
              %s71 = sphi %s56, %s56
              %s72 = sphi %s51, %s51
            $region31: #{custom-call.24} parent=27 // loop_header_branch
              %69 = sbr.rel (%p67) target = $region35
            $region32: #{custom-call.24} parent=27 // loop_body
              %v73 = vld [vmem:[%s71] sm:%s64]
              %74 = vst [vmem:[%s72] sm:%s64] %v73
            $region33: #{custom-call.24} parent=27 // loop_footer
              %s70 = sadd.s32 1, %s66
            $region34: #{custom-call.24} parent=27 // loop_footer_branch
              %65 = sbr.rel target = $region30
            $region35: #{custom-call.24} parent=27 // loop_exit
              _
          $region28: #{custom-call.24} parent=19 // pred_fallthru
            _
        $region20: #{custom-call.24} parent=15 // pred_fallthru
          _
        %89 = vnop
      $region16: #{custom-call.24} parent=5 // pred_fallthru
        _
      %p90 = scmp.le.s32.totalorder 1, %s3
      %p91 = scmp.lt.s32.totalorder %s3, 3
      %p92 = pnand %p90, %p91
      %p93 = pneg %p92
      // Predicated region
      $region51: #{custom-call.24} parent=5 // pred_check
        _
      $region52: #{custom-call.24} parent=5 // pred_check_branch
        %95 = sbr.rel (%p92) target = $region54
      $region53: #{custom-call.24} parent=5 // pred_region
        #allocation2 [shape = 'f32[8,8]{1,0}', space=vmem, size = 0x1000, scoped, tag = 'rescaled input a']
        %s96 = ssub.s32 %s3, 1
        %s97 = sand.u32 %s8, 1
        %s98 = sand.u32 %s8, 1
        %s99 = smul.addr %s98, 8
        %s100 = scalar_lea.vmem [#allocation0], %s99
        %s101 = sand.u32 %s8, 1
        %s102 = sand.u32 %s8, 1
        %s103 = smul.addr %s102, 8
        %s104 = scalar_lea.vmem [#allocation0], %s103
        %s105 = sand.u32 %s8, 1
        %s106 = sand.u32 %s8, 1
        %s107 = smul.addr %s106, 8
        %s108 = scalar_lea.vmem [#allocation1], %s107
        %v109 = vlaneseq
        %v110 = vand.u32 %v109, 127
        %vm111 = vcmp.lt.s32.totalorder %v110, 8
        %v112 = vlaneseq
        %v113 = vshrl.u32 %v112, 7
        %vm115 = vcmp.eq.s32.totalorder %v113, %v110
        %v116 = vld [vmem:[%s100] sm:$0xff]
        %v117 = vsel %vm115, %v116, 0.0
        %118 = vadd.xlane.f32.xlu0 %v117
        %v119 = vpop.xlane.xlu0 %118
        %vm120 = vcmp.ge.s32.totalorder %v113, %v110
        %vm121 = vmand %vm120, %vm111
        %v122 = vsel %vm121, %v116, 0.0
        %v123 = vrcp.pop %v119
        %v124 = vmul.f32 %v122, %v123
        %125 = vst [vmem:[#allocation2] sm:$0xff] %v124
        %v126 = vlaneseq
        %v127 = vand.u32 %v126, 127
        %v128 = vlaneseq
        %v129 = vshrl.u32 %v128, 7
        %vm131 = vcmp.eq.s32.totalorder %v127, %v129
        %v132 = vlaneseq
        %v133 = vand.u32 %v132, 127
        %vm134 = vcmp.eq.s32.totalorder %v133, 0
        %v135 = vsel %vm134, 1.0, -1.0
        %v136 = vsel %vm131, %v135, 0.0
        %s137 = scalar_lea.vmem [#allocation2], 1
        %v138 = vld [vmem:[%s137] ss:$0 sm:$0xff]
        %v139 = vxor.u32 %v138, 2147483648
        %v140 = vlaneseq
        %v141 = vand.u32 %v140, 127
        %vm142 = vcmp.eq.s32.totalorder %v141, 1
        %v143 = vmul.f32 %v139, %v136
        %144 = vadd.xlane.f32.xlu0 %v143
        %v145 = vpop.xlane.xlu0 %144
        %v146 = vsel %vm142, %v145, %v136
        %s147 = scalar_lea.vmem [#allocation2], 2
        %v148 = vld [vmem:[%s147] ss:$0 sm:$0xff]
        %v149 = vxor.u32 %v148, 2147483648
        %v150 = vlaneseq
        %v151 = vand.u32 %v150, 127
        %vm152 = vcmp.eq.s32.totalorder %v151, 2
        %v153 = vmul.f32 %v149, %v146
        %154 = vadd.xlane.f32.xlu0 %v153
        %v155 = vpop.xlane.xlu0 %154
        %v156 = vsel %vm152, %v155, %v146
        %s157 = scalar_lea.vmem [#allocation2], 3
        %v158 = vld [vmem:[%s157] ss:$0 sm:$0xff]
        %v159 = vxor.u32 %v158, 2147483648
        %v160 = vlaneseq
        %v161 = vand.u32 %v160, 127
        %vm162 = vcmp.eq.s32.totalorder %v161, 3
        %v163 = vmul.f32 %v159, %v156
        %164 = vadd.xlane.f32.xlu0 %v163
        %v165 = vpop.xlane.xlu0 %164
        %v166 = vsel %vm162, %v165, %v156
        %s167 = scalar_lea.vmem [#allocation2], 4
        %v168 = vld [vmem:[%s167] ss:$0 sm:$0xff]
        %v169 = vxor.u32 %v168, 2147483648
        %v170 = vlaneseq
        %v171 = vand.u32 %v170, 127
        %vm172 = vcmp.eq.s32.totalorder %v171, 4
        %v173 = vmul.f32 %v169, %v166
        %174 = vadd.xlane.f32.xlu0 %v173
        %v175 = vpop.xlane.xlu0 %174
        %v176 = vsel %vm172, %v175, %v166
        %s177 = scalar_lea.vmem [#allocation2], 5
        %v178 = vld [vmem:[%s177] ss:$0 sm:$0xff]
        %v179 = vxor.u32 %v178, 2147483648
        %v180 = vlaneseq
        %v181 = vand.u32 %v180, 127
        %vm182 = vcmp.eq.s32.totalorder %v181, 5
        %v183 = vmul.f32 %v179, %v176
        %184 = vadd.xlane.f32.xlu0 %v183
        %v185 = vpop.xlane.xlu0 %184
        %v186 = vsel %vm182, %v185, %v176
        %s187 = scalar_lea.vmem [#allocation2], 6
        %v188 = vld [vmem:[%s187] ss:$0 sm:$0xff]
        %v189 = vxor.u32 %v188, 2147483648
        %v190 = vlaneseq
        %v191 = vand.u32 %v190, 127
        %vm192 = vcmp.eq.s32.totalorder %v191, 6
        %v193 = vmul.f32 %v189, %v186
        %194 = vadd.xlane.f32.xlu0 %v193
        %v195 = vpop.xlane.xlu0 %194
        %v196 = vsel %vm192, %v195, %v186
        %s197 = scalar_lea.vmem [#allocation2], 7
        %v198 = vld [vmem:[%s197] ss:$0 sm:$0xff]
        %v199 = vxor.u32 %v198, 2147483648
        %v200 = vlaneseq
        %v201 = vand.u32 %v200, 127
        %vm202 = vcmp.eq.s32.totalorder %v201, 7
        %v203 = vmul.f32 %v199, %v196
        %204 = vadd.xlane.f32.xlu0 %v203
        %v205 = vpop.xlane.xlu0 %204
        %v206 = vsel %vm202, %v205, %v196
        %v207 = vrcp.pop %v119
        %v208 = vmul.f32 %v206, %v207
        %vm209 = vweird.f32 %v119
        %v210 = vsel %vm209, %v206, %v208
        %211 = vst [vmem:[%s108] sm:$0xff] %v210
        %s212 = sand.u32 %s8, 1
        %s213 = sand.u32 %s8, 1
        %s214 = smul.addr %s213, 8
        %s215 = scalar_lea.vmem [#allocation1], %s214
        %s216 = sadd.s32 %s17, %s16
        %s217 = sadd.s32 %s216, %s15
        %s218 = sadd.s32 %s217, %s14
        %s219 = smul.addr %s218, 8
        %s220 = scalar_lea.vmem %s1, %s219
        // Predicated region
        $region55: #{custom-call.24} parent=53 // pred_check
          _
        $region56: #{custom-call.24} parent=53 // pred_check_branch
          %222 = sbr.rel (0) target = $region58
        $region57: #{custom-call.24} parent=53 // pred_region
          // Predicated region
          $region59: #{custom-call.24} parent=57 // pred_check
            _
          $region60: #{custom-call.24} parent=57 // pred_check_branch
            %224 = sbr.rel (0) target = $region62
          $region61: #{custom-call.24} parent=57 // pred_region
            // Predicated region
            $region74: #{custom-call.24} parent=61 // pred_check
              _
            $region75: #{custom-call.24} parent=61 // pred_check_branch
              %240 = sbr.rel (0) target = $region77
            $region76: #{custom-call.24} parent=61 // pred_region
              loop: start=0, step=1, limit=1
              $region78: #{custom-call.24} parent=76 // loop_pre_header
                _
              $region79: #{custom-call.24} parent=76 // loop_header
                %s242 = sphi 0, %s246
                %p243 = scmp.ge.s32.totalorder %s242, 1
                %s247 = sphi %s215, %s215
                %s248 = sphi %s220, %s220
              $region80: #{custom-call.24} parent=76 // loop_header_branch
                %245 = sbr.rel (%p243) target = $region84
              $region81: #{custom-call.24} parent=76 // loop_body
                %v249 = vld [vmem:[%s247] sm:$0xff]
                %250 = vst [vmem:[%s248] sm:$0xff] %v249
              $region82: #{custom-call.24} parent=76 // loop_footer
                %s246 = sadd.s32 1, %s242
              $region83: #{custom-call.24} parent=76 // loop_footer_branch
                %241 = sbr.rel target = $region79
              $region84: #{custom-call.24} parent=76 // loop_exit
                _
            $region77: #{custom-call.24} parent=61 // pred_fallthru
              _
            // Predicated region
            $region85: #{custom-call.24} parent=61 // pred_check
              _
            $region86: #{custom-call.24} parent=61 // pred_check_branch
              %252 = sbr.rel target = $region88
            $region87: #{custom-call.24} parent=61 // pred_region
              _
            $region88: #{custom-call.24} parent=61 // pred_fallthru
              _
          $region62: #{custom-call.24} parent=57 // pred_fallthru
            _
          // Predicated region
          $region63: #{custom-call.24} parent=57 // pred_check
            _
          $region64: #{custom-call.24} parent=57 // pred_check_branch
            %226 = sbr.rel target = $region66
          $region65: #{custom-call.24} parent=57 // pred_region
            %s228 = ssub.s32 256, 1
            loop: start=0, step=1, limit=1
            $region67: #{custom-call.24} parent=65 // loop_pre_header
              _
            $region68: #{custom-call.24} parent=65 // loop_header
              %s230 = sphi 0, %s234
              %p231 = scmp.ge.s32.totalorder %s230, 1
              %s235 = sphi %s215, %s215
              %s236 = sphi %s220, %s220
            $region69: #{custom-call.24} parent=65 // loop_header_branch
              %233 = sbr.rel (%p231) target = $region73
            $region70: #{custom-call.24} parent=65 // loop_body
              %v237 = vld [vmem:[%s235] sm:%s228]
              %238 = vst [vmem:[%s236] sm:%s228] %v237
            $region71: #{custom-call.24} parent=65 // loop_footer
              %s234 = sadd.s32 1, %s230
            $region72: #{custom-call.24} parent=65 // loop_footer_branch
              %229 = sbr.rel target = $region68
            $region73: #{custom-call.24} parent=65 // loop_exit
              _
          $region66: #{custom-call.24} parent=57 // pred_fallthru
            _
        $region58: #{custom-call.24} parent=53 // pred_fallthru
          _
        %253 = vnop
      $region54: #{custom-call.24} parent=5 // pred_fallthru
        _
      %p254 = scmp.le.s32.totalorder 2, %s3
      // Predicated region
      $region89: #{custom-call.24} parent=5 // pred_check
        %p255 = pneg %p254
      $region90: #{custom-call.24} parent=5 // pred_check_branch
        %257 = sbr.rel (%p255) target = $region92
      $region91: #{custom-call.24} parent=5 // pred_region
        %s258 = ssub.s32 %s3, 2
        %s259 = sand.u32 %s9, 1
        %s260 = sand.u32 %s9, 1
        %s261 = smul.addr %s260, 8
        %s262 = scalar_lea.vmem [#allocation1], %s261
      $region92: #{custom-call.24} parent=5 // pred_fallthru
        _
    $region6: #{custom-call.24} parent=1 // loop_footer
      %s7 = sadd.s32 1, %s3
    $region7: #{custom-call.24} parent=1 // loop_footer_branch
      %2 = sbr.rel target = $region3
    $region8: #{custom-call.24} parent=1 // loop_exit
      _

// kernel: custom-call.23
$region0: #{custom-call.23}
  %s0 = inlined_call_operand.vmem [shape: f32[2,1,8,8], index: 0, kind: input, shape index: {}]
  %s1 = inlined_call_operand.vmem [shape: f32[2,1,8,8], index: 1, kind: output, shape index: {}]
  $region1: #{custom-call.23} parent=0
    #allocation0 [shape = 'u8[8192]{0}', space=vmem, size = 0x2000, scoped, tag = 'operand span for operand 0']
    #allocation1 [shape = 'u8[8192]{0}', space=vmem, size = 0x2000, scoped, tag = 'operand span for operand 1']
    loop: start=0, step=1, limit=4
    $region2: #{custom-call.23} parent=1 // loop_pre_header
      _
    $region3: #{custom-call.23} parent=1 // loop_header
      %s3 = sphi 0, %s7
      %p4 = scmp.ge.s32.totalorder %s3, 4
      %s10 = sphi 0, %s36
      %s11 = sphi 0, %s32
      %s12 = sphi 0, %s28
      %s13 = sphi 0, %s24
      %s14 = sphi 0, %s10
      %s15 = sphi 0, %s11
      %s16 = sphi 0, %s12
      %s17 = sphi 0, %s13
      %s18 = sphi 0, %s14
      %s19 = sphi 0, %s15
      %s20 = sphi 0, %s16
      %s21 = sphi 0, %s17
    $region4: #{custom-call.23} parent=1 // loop_header_branch
      %6 = sbr.rel (%p4) target = $region8
    $region5: #{custom-call.23} parent=1 // loop_body
      %s8 = ssub.s32 %s3, 1
      %s9 = ssub.s32 %s3, 2
      %s22 = sadd.s32 1, %s13
      %p23 = scmp.ge.s32.totalorder %s22, 1
      %s24 = scalar_select %p23, 0, %s22
      %s25 = sadd.s32 1, %s12
      %s26 = scalar_select %p23, %s25, %s12
      %p27 = scmp.ge.s32.totalorder %s26, 1
      %s28 = scalar_select %p27, 0, %s26
      %s29 = sadd.s32 1, %s11
      %s30 = scalar_select %p27, %s29, %s11
      %p31 = scmp.ge.s32.totalorder %s30, 1
      %s32 = scalar_select %p31, 0, %s30
      %s33 = sadd.s32 1, %s10
      %s34 = scalar_select %p31, %s33, %s10
      %p35 = scmp.ge.s32.totalorder %s34, 2
      %s36 = scalar_select %p35, 0, %s34
      %p37 = scmp.le.s32.totalorder 1, %s3
      %p38 = scmp.lt.s32.totalorder %s3, 3
      %p39 = pnand %p37, %p38
      %p40 = pneg %p39
      // Predicated region
      $region9: #{custom-call.23} parent=5 // pred_check
        _
      $region10: #{custom-call.23} parent=5 // pred_check_branch
        %42 = sbr.rel (%p39) target = $region12
      $region11: #{custom-call.23} parent=5 // pred_region
        %s43 = ssub.s32 %s3, 1
      $region12: #{custom-call.23} parent=5 // pred_fallthru
        _
      %p44 = scmp.lt.s32.totalorder %s3, 2
      // Predicated region
      $region13: #{custom-call.23} parent=5 // pred_check
        %p45 = pneg %p44
      $region14: #{custom-call.23} parent=5 // pred_check_branch
        %47 = sbr.rel (%p45) target = $region16
      $region15: #{custom-call.23} parent=5 // pred_region
        %s48 = sand.u32 %s3, 1
        %s49 = sand.u32 %s3, 1
        %s50 = smul.addr %s49, 8
        %s51 = scalar_lea.vmem [#allocation0], %s50
        %s52 = sadd.s32 %s13, %s12
        %s53 = sadd.s32 %s52, %s11
        %s54 = sadd.s32 %s53, %s10
        %s55 = smul.addr %s54, 8
        %s56 = scalar_lea.vmem %s0, %s55
        // Predicated region
        $region17: #{custom-call.23} parent=15 // pred_check
          _
        $region18: #{custom-call.23} parent=15 // pred_check_branch
          %58 = sbr.rel (0) target = $region20
        $region19: #{custom-call.23} parent=15 // pred_region
          // Predicated region
          $region21: #{custom-call.23} parent=19 // pred_check
            _
          $region22: #{custom-call.23} parent=19 // pred_check_branch
            %60 = sbr.rel (0) target = $region24
          $region23: #{custom-call.23} parent=19 // pred_region
            // Predicated region
            $region36: #{custom-call.23} parent=23 // pred_check
              _
            $region37: #{custom-call.23} parent=23 // pred_check_branch
              %76 = sbr.rel (0) target = $region39
            $region38: #{custom-call.23} parent=23 // pred_region
              loop: start=0, step=1, limit=1
              $region40: #{custom-call.23} parent=38 // loop_pre_header
                _
              $region41: #{custom-call.23} parent=38 // loop_header
                %s78 = sphi 0, %s82
                %p79 = scmp.ge.s32.totalorder %s78, 1
                %s83 = sphi %s56, %s56
                %s84 = sphi %s51, %s51
              $region42: #{custom-call.23} parent=38 // loop_header_branch
                %81 = sbr.rel (%p79) target = $region46
              $region43: #{custom-call.23} parent=38 // loop_body
                %v85 = vld [vmem:[%s83] sm:$0xff]
                %86 = vst [vmem:[%s84] sm:$0xff] %v85
              $region44: #{custom-call.23} parent=38 // loop_footer
                %s82 = sadd.s32 1, %s78
              $region45: #{custom-call.23} parent=38 // loop_footer_branch
                %77 = sbr.rel target = $region41
              $region46: #{custom-call.23} parent=38 // loop_exit
                _
            $region39: #{custom-call.23} parent=23 // pred_fallthru
              _
            // Predicated region
            $region47: #{custom-call.23} parent=23 // pred_check
              _
            $region48: #{custom-call.23} parent=23 // pred_check_branch
              %88 = sbr.rel target = $region50
            $region49: #{custom-call.23} parent=23 // pred_region
              _
            $region50: #{custom-call.23} parent=23 // pred_fallthru
              _
          $region24: #{custom-call.23} parent=19 // pred_fallthru
            _
          // Predicated region
          $region25: #{custom-call.23} parent=19 // pred_check
            _
          $region26: #{custom-call.23} parent=19 // pred_check_branch
            %62 = sbr.rel target = $region28
          $region27: #{custom-call.23} parent=19 // pred_region
            %s64 = ssub.s32 256, 1
            loop: start=0, step=1, limit=1
            $region29: #{custom-call.23} parent=27 // loop_pre_header
              _
            $region30: #{custom-call.23} parent=27 // loop_header
              %s66 = sphi 0, %s70
              %p67 = scmp.ge.s32.totalorder %s66, 1
              %s71 = sphi %s56, %s56
              %s72 = sphi %s51, %s51
            $region31: #{custom-call.23} parent=27 // loop_header_branch
              %69 = sbr.rel (%p67) target = $region35
            $region32: #{custom-call.23} parent=27 // loop_body
              %v73 = vld [vmem:[%s71] sm:%s64]
              %74 = vst [vmem:[%s72] sm:%s64] %v73
            $region33: #{custom-call.23} parent=27 // loop_footer
              %s70 = sadd.s32 1, %s66
            $region34: #{custom-call.23} parent=27 // loop_footer_branch
              %65 = sbr.rel target = $region30
            $region35: #{custom-call.23} parent=27 // loop_exit
              _
          $region28: #{custom-call.23} parent=19 // pred_fallthru
            _
        $region20: #{custom-call.23} parent=15 // pred_fallthru
          _
        %89 = vnop
      $region16: #{custom-call.23} parent=5 // pred_fallthru
        _
      %p90 = scmp.le.s32.totalorder 1, %s3
      %p91 = scmp.lt.s32.totalorder %s3, 3
      %p92 = pnand %p90, %p91
      %p93 = pneg %p92
      // Predicated region
      $region51: #{custom-call.23} parent=5 // pred_check
        _
      $region52: #{custom-call.23} parent=5 // pred_check_branch
        %95 = sbr.rel (%p92) target = $region54
      $region53: #{custom-call.23} parent=5 // pred_region
        #allocation2 [shape = 'f32[8,8]{1,0}', space=vmem, size = 0x1000, scoped, tag = 'rescaled input a']
        %s96 = ssub.s32 %s3, 1
        %s97 = sand.u32 %s8, 1
        %s98 = sand.u32 %s8, 1
        %s99 = smul.addr %s98, 8
        %s100 = scalar_lea.vmem [#allocation0], %s99
        %s101 = sand.u32 %s8, 1
        %s102 = sand.u32 %s8, 1
        %s103 = smul.addr %s102, 8
        %s104 = scalar_lea.vmem [#allocation0], %s103
        %s105 = sand.u32 %s8, 1
        %s106 = sand.u32 %s8, 1
        %s107 = smul.addr %s106, 8
        %s108 = scalar_lea.vmem [#allocation1], %s107
        %v109 = vlaneseq
        %v110 = vand.u32 %v109, 127
        %vm111 = vcmp.lt.s32.totalorder %v110, 8
        %v112 = vlaneseq
        %v113 = vshrl.u32 %v112, 7
        %vm115 = vcmp.eq.s32.totalorder %v113, %v110
        %v116 = vld [vmem:[%s100] sm:$0xff]
        %v117 = vsel %vm115, %v116, 0.0
        %118 = vadd.xlane.f32.xlu0 %v117
        %v119 = vpop.xlane.xlu0 %118
        %vm120 = vcmp.le.s32.totalorder %v113, %v110
        %vm121 = vmand %vm120, %vm111
        %v122 = vsel %vm121, %v116, 0.0
        %v123 = vrcp.pop %v119
        %v124 = vmul.f32 %v122, %v123
        %125 = vst [vmem:[#allocation2] sm:$0xff] %v124
        %v126 = vlaneseq
        %v127 = vand.u32 %v126, 127
        %v128 = vlaneseq
        %v129 = vshrl.u32 %v128, 7
        %vm131 = vcmp.eq.s32.totalorder %v127, %v129
        %v132 = vlaneseq
        %v133 = vand.u32 %v132, 127
        %vm134 = vcmp.eq.s32.totalorder %v133, 7
        %v135 = vsel %vm134, 1.0, -1.0
        %v136 = vsel %vm131, %v135, 0.0
        %s137 = scalar_lea.vmem [#allocation2], 6
        %v138 = vld [vmem:[%s137] ss:$0 sm:$0xff]
        %v139 = vxor.u32 %v138, 2147483648
        %v140 = vlaneseq
        %v141 = vand.u32 %v140, 127
        %vm142 = vcmp.eq.s32.totalorder %v141, 6
        %v143 = vmul.f32 %v139, %v136
        %144 = vadd.xlane.f32.xlu0 %v143
        %v145 = vpop.xlane.xlu0 %144
        %v146 = vsel %vm142, %v145, %v136
        %s147 = scalar_lea.vmem [#allocation2], 5
        %v148 = vld [vmem:[%s147] ss:$0 sm:$0xff]
        %v149 = vxor.u32 %v148, 2147483648
        %v150 = vlaneseq
        %v151 = vand.u32 %v150, 127
        %vm152 = vcmp.eq.s32.totalorder %v151, 5
        %v153 = vmul.f32 %v149, %v146
        %154 = vadd.xlane.f32.xlu0 %v153
        %v155 = vpop.xlane.xlu0 %154
        %v156 = vsel %vm152, %v155, %v146
        %s157 = scalar_lea.vmem [#allocation2], 4
        %v158 = vld [vmem:[%s157] ss:$0 sm:$0xff]
        %v159 = vxor.u32 %v158, 2147483648
        %v160 = vlaneseq
        %v161 = vand.u32 %v160, 127
        %vm162 = vcmp.eq.s32.totalorder %v161, 4
        %v163 = vmul.f32 %v159, %v156
        %164 = vadd.xlane.f32.xlu0 %v163
        %v165 = vpop.xlane.xlu0 %164
        %v166 = vsel %vm162, %v165, %v156
        %s167 = scalar_lea.vmem [#allocation2], 3
        %v168 = vld [vmem:[%s167] ss:$0 sm:$0xff]
        %v169 = vxor.u32 %v168, 2147483648
        %v170 = vlaneseq
        %v171 = vand.u32 %v170, 127
        %vm172 = vcmp.eq.s32.totalorder %v171, 3
        %v173 = vmul.f32 %v169, %v166
        %174 = vadd.xlane.f32.xlu0 %v173
        %v175 = vpop.xlane.xlu0 %174
        %v176 = vsel %vm172, %v175, %v166
        %s177 = scalar_lea.vmem [#allocation2], 2
        %v178 = vld [vmem:[%s177] ss:$0 sm:$0xff]
        %v179 = vxor.u32 %v178, 2147483648
        %v180 = vlaneseq
        %v181 = vand.u32 %v180, 127
        %vm182 = vcmp.eq.s32.totalorder %v181, 2
        %v183 = vmul.f32 %v179, %v176
        %184 = vadd.xlane.f32.xlu0 %v183
        %v185 = vpop.xlane.xlu0 %184
        %v186 = vsel %vm182, %v185, %v176
        %s187 = scalar_lea.vmem [#allocation2], 1
        %v188 = vld [vmem:[%s187] ss:$0 sm:$0xff]
        %v189 = vxor.u32 %v188, 2147483648
        %v190 = vlaneseq
        %v191 = vand.u32 %v190, 127
        %vm192 = vcmp.eq.s32.totalorder %v191, 1
        %v193 = vmul.f32 %v189, %v186
        %194 = vadd.xlane.f32.xlu0 %v193
        %v195 = vpop.xlane.xlu0 %194
        %v196 = vsel %vm192, %v195, %v186
        %v197 = vld [vmem:[#allocation2] ss:$0 sm:$0xff]
        %v198 = vxor.u32 %v197, 2147483648
        %v199 = vlaneseq
        %v200 = vand.u32 %v199, 127
        %vm201 = vcmp.eq.s32.totalorder %v200, 0
        %v202 = vmul.f32 %v198, %v196
        %203 = vadd.xlane.f32.xlu0 %v202
        %v204 = vpop.xlane.xlu0 %203
        %v205 = vsel %vm201, %v204, %v196
        %v206 = vrcp.pop %v119
        %v207 = vmul.f32 %v205, %v206
        %vm208 = vweird.f32 %v119
        %v209 = vsel %vm208, %v205, %v207
        %210 = vst [vmem:[%s108] sm:$0xff] %v209
        %s211 = sand.u32 %s8, 1
        %s212 = sand.u32 %s8, 1
        %s213 = smul.addr %s212, 8
        %s214 = scalar_lea.vmem [#allocation1], %s213
        %s215 = sadd.s32 %s17, %s16
        %s216 = sadd.s32 %s215, %s15
        %s217 = sadd.s32 %s216, %s14
        %s218 = smul.addr %s217, 8
        %s219 = scalar_lea.vmem %s1, %s218
        // Predicated region
        $region55: #{custom-call.23} parent=53 // pred_check
          _
        $region56: #{custom-call.23} parent=53 // pred_check_branch
          %221 = sbr.rel (0) target = $region58
        $region57: #{custom-call.23} parent=53 // pred_region
          // Predicated region
          $region59: #{custom-call.23} parent=57 // pred_check
            _
          $region60: #{custom-call.23} parent=57 // pred_check_branch
            %223 = sbr.rel (0) target = $region62
          $region61: #{custom-call.23} parent=57 // pred_region
            // Predicated region
            $region74: #{custom-call.23} parent=61 // pred_check
              _
            $region75: #{custom-call.23} parent=61 // pred_check_branch
              %239 = sbr.rel (0) target = $region77
            $region76: #{custom-call.23} parent=61 // pred_region
              loop: start=0, step=1, limit=1
              $region78: #{custom-call.23} parent=76 // loop_pre_header
                _
              $region79: #{custom-call.23} parent=76 // loop_header
                %s241 = sphi 0, %s245
                %p242 = scmp.ge.s32.totalorder %s241, 1
                %s246 = sphi %s214, %s214
                %s247 = sphi %s219, %s219
              $region80: #{custom-call.23} parent=76 // loop_header_branch
                %244 = sbr.rel (%p242) target = $region84
              $region81: #{custom-call.23} parent=76 // loop_body
                %v248 = vld [vmem:[%s246] sm:$0xff]
                %249 = vst [vmem:[%s247] sm:$0xff] %v248
              $region82: #{custom-call.23} parent=76 // loop_footer
                %s245 = sadd.s32 1, %s241
              $region83: #{custom-call.23} parent=76 // loop_footer_branch
                %240 = sbr.rel target = $region79
              $region84: #{custom-call.23} parent=76 // loop_exit
                _
            $region77: #{custom-call.23} parent=61 // pred_fallthru
              _
            // Predicated region
            $region85: #{custom-call.23} parent=61 // pred_check
              _
            $region86: #{custom-call.23} parent=61 // pred_check_branch
              %251 = sbr.rel target = $region88
            $region87: #{custom-call.23} parent=61 // pred_region
              _
            $region88: #{custom-call.23} parent=61 // pred_fallthru
              _
          $region62: #{custom-call.23} parent=57 // pred_fallthru
            _
          // Predicated region
          $region63: #{custom-call.23} parent=57 // pred_check
            _
          $region64: #{custom-call.23} parent=57 // pred_check_branch
            %225 = sbr.rel target = $region66
          $region65: #{custom-call.23} parent=57 // pred_region
            %s227 = ssub.s32 256, 1
            loop: start=0, step=1, limit=1
            $region67: #{custom-call.23} parent=65 // loop_pre_header
              _
            $region68: #{custom-call.23} parent=65 // loop_header
              %s229 = sphi 0, %s233
              %p230 = scmp.ge.s32.totalorder %s229, 1
              %s234 = sphi %s214, %s214
              %s235 = sphi %s219, %s219
            $region69: #{custom-call.23} parent=65 // loop_header_branch
              %232 = sbr.rel (%p230) target = $region73
            $region70: #{custom-call.23} parent=65 // loop_body
              %v236 = vld [vmem:[%s234] sm:%s227]
              %237 = vst [vmem:[%s235] sm:%s227] %v236
            $region71: #{custom-call.23} parent=65 // loop_footer
              %s233 = sadd.s32 1, %s229
            $region72: #{custom-call.23} parent=65 // loop_footer_branch
              %228 = sbr.rel target = $region68
            $region73: #{custom-call.23} parent=65 // loop_exit
              _
          $region66: #{custom-call.23} parent=57 // pred_fallthru
            _
        $region58: #{custom-call.23} parent=53 // pred_fallthru
          _
        %252 = vnop
      $region54: #{custom-call.23} parent=5 // pred_fallthru
        _
      %p253 = scmp.le.s32.totalorder 2, %s3
      // Predicated region
      $region89: #{custom-call.23} parent=5 // pred_check
        %p254 = pneg %p253
      $region90: #{custom-call.23} parent=5 // pred_check_branch
        %256 = sbr.rel (%p254) target = $region92
      $region91: #{custom-call.23} parent=5 // pred_region
        %s257 = ssub.s32 %s3, 2
        %s258 = sand.u32 %s9, 1
        %s259 = sand.u32 %s9, 1
        %s260 = smul.addr %s259, 8
        %s261 = scalar_lea.vmem [#allocation1], %s260
      $region92: #{custom-call.23} parent=5 // pred_fallthru
        _
    $region6: #{custom-call.23} parent=1 // loop_footer
      %s7 = sadd.s32 1, %s3
    $region7: #{custom-call.23} parent=1 // loop_footer_branch
      %2 = sbr.rel target = $region3
    $region8: #{custom-call.23} parent=1 // loop_exit
      _

// kernel: networked_rens_forward.1
$region0: #{networked_rens_forward.1}
  #allocation0 [shape = 'u32[]', space=smem, size = 0x4, offset = 0x4, fixed_abs, tag = 'smem constant byte address 0x4 - core index']
  #allocation1 [shape = 'u32[144,128]{1,0:T(1,128)}', space=vmem, size = 0x12000, scoped, tag = 'internal scratch']
  %s0 = inlined_call_operand.vmem [shape: f32[2,16], index: 0, kind: input, shape index: {}]
  %s1 = inlined_call_operand.vmem [shape: f32[2,4,16], index: 1, kind: input, shape index: {}]
  %s2 = inlined_call_operand.vmem [shape: f32[2,8], index: 2, kind: input, shape index: {}]
  %s3 = inlined_call_operand.vmem [shape: f32[2,8,12], index: 3, kind: input, shape index: {}]
  %s4 = inlined_call_operand.vmem [shape: f32[2,8,8], index: 4, kind: input, shape index: {}]
  %s5 = inlined_call_operand.vmem [shape: f32[2,8], index: 5, kind: input, shape index: {}]
  %s6 = inlined_call_operand.vmem [shape: f32[2,14,20], index: 6, kind: input, shape index: {}]
  %s7 = inlined_call_operand.vmem [shape: f32[2,14], index: 7, kind: output, shape index: {}]
  %s8 = sld [smem:[#allocation0]]
  $region38: #{networked_rens_forward.1} parent=0
    _
  %s10 = ssub.s32 1, %s8
  %s11 = scalar_select 0, %s10, %s8
  // Predicated region
  $region2: #{networked_rens_forward.1} parent=0 // pred_check
    _
  $region3: #{networked_rens_forward.1} parent=0 // pred_check_branch
    %13 = sbr.rel (0) target = $region5
  $region4: #{networked_rens_forward.1} parent=0 // pred_region
    _
  $region5: #{networked_rens_forward.1} parent=0 // pred_fallthru
    _
  // Predicated region
  $region6: #{networked_rens_forward.1} parent=0 // pred_check
    _
  $region7: #{networked_rens_forward.1} parent=0 // pred_check_branch
    %15 = sbr.rel (0) target = $region9
  $region8: #{networked_rens_forward.1} parent=0 // pred_region
    _
  $region9: #{networked_rens_forward.1} parent=0 // pred_fallthru
    _
  // Predicated region
  $region10: #{networked_rens_forward.1} parent=0 // pred_check
    _
  $region11: #{networked_rens_forward.1} parent=0 // pred_check_branch
    %17 = sbr.rel (0) target = $region13
  $region12: #{networked_rens_forward.1} parent=0 // pred_region
    _
  $region13: #{networked_rens_forward.1} parent=0 // pred_fallthru
    _
  // Predicated region
  $region14: #{networked_rens_forward.1} parent=0 // pred_check
    _
  $region15: #{networked_rens_forward.1} parent=0 // pred_check_branch
    %19 = sbr.rel (0) target = $region17
  $region16: #{networked_rens_forward.1} parent=0 // pred_region
    _
  $region17: #{networked_rens_forward.1} parent=0 // pred_fallthru
    _
  // Predicated region
  $region18: #{networked_rens_forward.1} parent=0 // pred_check
    _
  $region19: #{networked_rens_forward.1} parent=0 // pred_check_branch
    %21 = sbr.rel (0) target = $region21
  $region20: #{networked_rens_forward.1} parent=0 // pred_region
    _
  $region21: #{networked_rens_forward.1} parent=0 // pred_fallthru
    _
  // Predicated region
  $region22: #{networked_rens_forward.1} parent=0 // pred_check
    _
  $region23: #{networked_rens_forward.1} parent=0 // pred_check_branch
    %23 = sbr.rel (0) target = $region25
  $region24: #{networked_rens_forward.1} parent=0 // pred_region
    _
  $region25: #{networked_rens_forward.1} parent=0 // pred_fallthru
    _
  // Predicated region
  $region26: #{networked_rens_forward.1} parent=0 // pred_check
    _
  $region27: #{networked_rens_forward.1} parent=0 // pred_check_branch
    %25 = sbr.rel (0) target = $region29
  $region28: #{networked_rens_forward.1} parent=0 // pred_region
    _
  $region29: #{networked_rens_forward.1} parent=0 // pred_fallthru
    _
  %v26 = vld [vmem:[%s0] sm:$0x3]
  %v27 = vld [vmem:[%s2] sm:$0x3]
  %v28 = vld [vmem:[%s4] sm:$0xff]
  %v29 = vld [vmem:[%s4 + $0x8] sm:$0xff]
  %v30 = vld [vmem:[%s5] sm:$0x3]
  %v31 = vrcp.pop %v30
  %v32 = vmul.f32 1.0, %v31
  %v33 = vld [vmem:[%s1] sm:$0xf]
  %v34 = vld [vmem:[%s1 + $0x4] sm:$0xf]
  %v37 = vunpack.c.l.s4 1966171168
  %v38 = vunpack.c.0.s8 %v37
  %v39 = vlaneseq
  %v40 = vshrl.u32 %v39, 7
  %v41 = vsub.s32 %v38, %v40
  %v42 = vrot.slane %v26, %v41
  %v43 = vcombine.high %v42, %v42
  %v45 = vunpack.c.l.s4 1966171168
  %v46 = vunpack.c.0.s8 %v45
  %v47 = vlaneseq
  %v48 = vshrl.u32 %v47, 7
  %v49 = vsub.s32 %v46, %v48
  %v50 = vrot.slane %v42, %v49
  %v52 = vunpack.c.l.s4 1966171168
  %v53 = vunpack.c.0.s8 %v52
  %v54 = vlaneseq
  %v55 = vshrl.u32 %v54, 7
  %v56 = vsub.s32 %v53, %v55
  %v57 = vrot.slane %v43, %v56
  %v58 = vlaneseq
  %v59 = vshrl.u32 %v58, 7
  %v60 = vsub.s32 0, %v59
  %v61 = vrot.slane %v50, %v60
  %v62 = vlaneseq
  %v63 = vshrl.u32 %v62, 7
  %v64 = vsub.s32 0, %v63
  %v65 = vrot.slane %v57, %v64
  %v68 = vmul.f32 %v61, %v33
  %v69 = vmul.f32 %v65, %v34
  %vm70 = vcmask 125952
  %v71 = vsel %vm70, %v68, 0.0
  %72 = vadd.xlane.f32.xlu0 %v71
  %v73 = vpop.xlane.xlu0 %72
  %v74 = vsel %vm70, %v69, 0.0
  %75 = vadd.xlane.f32.xlu0 %v74
  %v76 = vpop.xlane.xlu0 %75
  %v79 = vlaneseq
  %v80 = vand.u32 %v79, 127
  %v81 = vadd.s32 %v80, 4294967288
  %v82 = vlaneseq
  %v83 = vshrl.u32 %v82, 7
  %v84 = vsub.s32 %v81, %v83
  %v85 = vrot.slane %v73, %v84
  %v86 = vlaneseq
  %v87 = vshrl.u32 %v86, 7
  %v88 = vsub.s32 %v81, %v87
  %v89 = vrot.slane %v76, %v88
  %vm90 = vcmask 1041409
  %v91 = vsel %vm90, %v89, %v85
  %vm93 = vcmask 64512
  %v94 = vsel %vm93, %v27, %v91
  %v95 = vld [vmem:[%s3] sm:$0xff]
  %v96 = vld [vmem:[%s3 + $0x8] sm:$0xff]
  %v99 = vunpack.c.l.s4 1966171168
  %v100 = vunpack.c.0.s8 %v99
  %v101 = vlaneseq
  %v102 = vshrl.u32 %v101, 7
  %v103 = vsub.s32 %v100, %v102
  %v104 = vrot.slane %v94, %v103
  %v105 = vcombine.high %v104, %v104
  %v107 = vunpack.c.l.s4 1966171168
  %v108 = vunpack.c.0.s8 %v107
  %v109 = vlaneseq
  %v110 = vshrl.u32 %v109, 7
  %v111 = vsub.s32 %v108, %v110
  %v112 = vrot.slane %v104, %v111
  %v114 = vunpack.c.l.s4 1966171168
  %v115 = vunpack.c.0.s8 %v114
  %v116 = vlaneseq
  %v117 = vshrl.u32 %v116, 7
  %v118 = vsub.s32 %v115, %v117
  %v119 = vrot.slane %v105, %v118
  %v120 = vlaneseq
  %v121 = vshrl.u32 %v120, 7
  %v122 = vsub.s32 0, %v121
  %v123 = vrot.slane %v112, %v122
  %v124 = vlaneseq
  %v125 = vshrl.u32 %v124, 7
  %v126 = vsub.s32 0, %v125
  %v127 = vrot.slane %v119, %v126
  %v130 = vmul.f32 %v123, %v95
  %v131 = vmul.f32 %v127, %v96
  %vm132 = vcmask 97280
  %v133 = vsel %vm132, %v130, 0.0
  %134 = vadd.xlane.f32.xlu0 %v133
  %v135 = vpop.xlane.xlu0 %134
  %v136 = vsel %vm132, %v131, 0.0
  %137 = vadd.xlane.f32.xlu0 %v136
  %v138 = vpop.xlane.xlu0 %137
  %v140 = vlaneseq
  %v141 = vshrl.u32 %v140, 7
  %v142 = vsub.s32 0, %v141
  %v143 = vrot.slane %v32, %v142
  %145 = vbcast.lane.b32.xlu0 %v143, 256
  %v146 = vpop.permute.xlu0 %145
  %v147 = vlaneseq
  %v148 = vshrl.u32 %v147, 7
  %v149 = vsub.s32 1, %v148
  %v150 = vrot.slane %v32, %v149
  %152 = vbcast.lane.b32.xlu0 %v150, 256
  %v153 = vpop.permute.xlu0 %152
  %v156 = vmul.f32 %v135, %v146
  %v157 = vmul.f32 %v138, %v153
  %v158 = vmax.f32 %v156, 0.0
  %v159 = vmax.f32 %v157, 0.0
  %vm160 = vcmp.eq.s32.totalorder %v80, 0
  %v161 = vlaneseq
  %v162 = vshrl.u32 %v161, 7
  %v163 = vsub.s32 0, %v162
  %v164 = vrot.slane %v158, %v163
  %v165 = vlaneseq
  %v166 = vshrl.u32 %v165, 7
  %v167 = vsub.s32 0, %v166
  %v168 = vrot.slane %v159, %v167
  %171 = vset.pattern.permute.xlu0 0
  %172 = vperm.xlu0 %171, %v164
  %v173 = vpop.permute.xlu0 %172
  %174 = vset.pattern.permute.xlu0 0
  %175 = vperm.xlu0 %174, %v168
  %v176 = vpop.permute.xlu0 %175
  %v177 = vsel %vm90, %v176, %v173
  %v179 = vsel %vm160, %v177, 0.0
  %v182 = vlaneseq
  %v183 = vshrl.u32 %v182, 7
  %v184 = vsub.s32 0, %v183
  %v185 = vrot.slane %v28, %v184
  %187 = vbcast.lane.b32.xlu0 %v185, 256
  %v188 = vpop.permute.xlu0 %187
  %v189 = vlaneseq
  %v190 = vshrl.u32 %v189, 7
  %v191 = vsub.s32 0, %v190
  %v192 = vrot.slane %v29, %v191
  %194 = vbcast.lane.b32.xlu0 %v192, 256
  %v195 = vpop.permute.xlu0 %194
  %v198 = vmul.f32 %v164, %v188
  %v199 = vmul.f32 %v168, %v195
  %v200 = vadd.f32 %v135, %v198
  %v201 = vadd.f32 %v138, %v199
  %v202 = vmul.f32 %v200, %v146
  %v203 = vmul.f32 %v201, %v153
  %v204 = vmax.f32 %v202, 0.0
  %v205 = vmax.f32 %v203, 0.0
  %vm206 = vcmp.eq.s32.totalorder %v80, 1
  %v207 = vlaneseq
  %v208 = vshrl.u32 %v207, 7
  %v209 = vsub.s32 1, %v208
  %v210 = vrot.slane %v204, %v209
  %v211 = vlaneseq
  %v212 = vshrl.u32 %v211, 7
  %v213 = vsub.s32 1, %v212
  %v214 = vrot.slane %v205, %v213
  %217 = vset.pattern.permute.xlu0 0
  %218 = vperm.xlu0 %217, %v210
  %v219 = vpop.permute.xlu0 %218
  %220 = vset.pattern.permute.xlu0 0
  %221 = vperm.xlu0 %220, %v214
  %v222 = vpop.permute.xlu0 %221
  %v223 = vsel %vm90, %v222, %v219
  %v225 = vsel %vm206, %v223, %v179
  %v226 = vlaneseq
  %v227 = vshrl.u32 %v226, 7
  %v228 = vsub.s32 1, %v227
  %v229 = vrot.slane %v28, %v228
  %231 = vbcast.lane.b32.xlu0 %v229, 256
  %v232 = vpop.permute.xlu0 %231
  %v233 = vlaneseq
  %v234 = vshrl.u32 %v233, 7
  %v235 = vsub.s32 1, %v234
  %v236 = vrot.slane %v29, %v235
  %238 = vbcast.lane.b32.xlu0 %v236, 256
  %v239 = vpop.permute.xlu0 %238
  %v242 = vmul.f32 %v210, %v232
  %v243 = vmul.f32 %v214, %v239
  %v244 = vadd.f32 %v200, %v242
  %v245 = vadd.f32 %v201, %v243
  %v246 = vmul.f32 %v244, %v146
  %v247 = vmul.f32 %v245, %v153
  %v248 = vmax.f32 %v246, 0.0
  %v249 = vmax.f32 %v247, 0.0
  %vm250 = vcmp.eq.s32.totalorder %v80, 2
  %v251 = vlaneseq
  %v252 = vshrl.u32 %v251, 7
  %v253 = vsub.s32 2, %v252
  %v254 = vrot.slane %v248, %v253
  %v255 = vlaneseq
  %v256 = vshrl.u32 %v255, 7
  %v257 = vsub.s32 2, %v256
  %v258 = vrot.slane %v249, %v257
  %261 = vset.pattern.permute.xlu0 0
  %262 = vperm.xlu0 %261, %v254
  %v263 = vpop.permute.xlu0 %262
  %264 = vset.pattern.permute.xlu0 0
  %265 = vperm.xlu0 %264, %v258
  %v266 = vpop.permute.xlu0 %265
  %v267 = vsel %vm90, %v266, %v263
  %v269 = vsel %vm250, %v267, %v225
  %v270 = vlaneseq
  %v271 = vshrl.u32 %v270, 7
  %v272 = vsub.s32 2, %v271
  %v273 = vrot.slane %v28, %v272
  %275 = vbcast.lane.b32.xlu0 %v273, 256
  %v276 = vpop.permute.xlu0 %275
  %v277 = vlaneseq
  %v278 = vshrl.u32 %v277, 7
  %v279 = vsub.s32 2, %v278
  %v280 = vrot.slane %v29, %v279
  %282 = vbcast.lane.b32.xlu0 %v280, 256
  %v283 = vpop.permute.xlu0 %282
  %v286 = vmul.f32 %v254, %v276
  %v287 = vmul.f32 %v258, %v283
  %v288 = vadd.f32 %v244, %v286
  %v289 = vadd.f32 %v245, %v287
  %v290 = vmul.f32 %v288, %v146
  %v291 = vmul.f32 %v289, %v153
  %v292 = vmax.f32 %v290, 0.0
  %v293 = vmax.f32 %v291, 0.0
  %vm294 = vcmp.eq.s32.totalorder %v80, 3
  %v295 = vlaneseq
  %v296 = vshrl.u32 %v295, 7
  %v297 = vsub.s32 3, %v296
  %v298 = vrot.slane %v292, %v297
  %v299 = vlaneseq
  %v300 = vshrl.u32 %v299, 7
  %v301 = vsub.s32 3, %v300
  %v302 = vrot.slane %v293, %v301
  %305 = vset.pattern.permute.xlu0 0
  %306 = vperm.xlu0 %305, %v298
  %v307 = vpop.permute.xlu0 %306
  %308 = vset.pattern.permute.xlu0 0
  %309 = vperm.xlu0 %308, %v302
  %v310 = vpop.permute.xlu0 %309
  %v311 = vsel %vm90, %v310, %v307
  %v313 = vsel %vm294, %v311, %v269
  %v314 = vlaneseq
  %v315 = vshrl.u32 %v314, 7
  %v316 = vsub.s32 3, %v315
  %v317 = vrot.slane %v28, %v316
  %319 = vbcast.lane.b32.xlu0 %v317, 256
  %v320 = vpop.permute.xlu0 %319
  %v321 = vlaneseq
  %v322 = vshrl.u32 %v321, 7
  %v323 = vsub.s32 3, %v322
  %v324 = vrot.slane %v29, %v323
  %326 = vbcast.lane.b32.xlu0 %v324, 256
  %v327 = vpop.permute.xlu0 %326
  %v330 = vmul.f32 %v298, %v320
  %v331 = vmul.f32 %v302, %v327
  %v332 = vadd.f32 %v288, %v330
  %v333 = vadd.f32 %v289, %v331
  %v334 = vmul.f32 %v332, %v146
  %v335 = vmul.f32 %v333, %v153
  %v336 = vmax.f32 %v334, 0.0
  %v337 = vmax.f32 %v335, 0.0
  %vm338 = vcmp.eq.s32.totalorder %v80, 4
  %v339 = vlaneseq
  %v340 = vshrl.u32 %v339, 7
  %v341 = vsub.s32 4, %v340
  %v342 = vrot.slane %v336, %v341
  %v343 = vlaneseq
  %v344 = vshrl.u32 %v343, 7
  %v345 = vsub.s32 4, %v344
  %v346 = vrot.slane %v337, %v345
  %349 = vset.pattern.permute.xlu0 0
  %350 = vperm.xlu0 %349, %v342
  %v351 = vpop.permute.xlu0 %350
  %352 = vset.pattern.permute.xlu0 0
  %353 = vperm.xlu0 %352, %v346
  %v354 = vpop.permute.xlu0 %353
  %v355 = vsel %vm90, %v354, %v351
  %v357 = vsel %vm338, %v355, %v313
  %v358 = vlaneseq
  %v359 = vshrl.u32 %v358, 7
  %v360 = vsub.s32 4, %v359
  %v361 = vrot.slane %v28, %v360
  %363 = vbcast.lane.b32.xlu0 %v361, 256
  %v364 = vpop.permute.xlu0 %363
  %v365 = vlaneseq
  %v366 = vshrl.u32 %v365, 7
  %v367 = vsub.s32 4, %v366
  %v368 = vrot.slane %v29, %v367
  %370 = vbcast.lane.b32.xlu0 %v368, 256
  %v371 = vpop.permute.xlu0 %370
  %v374 = vmul.f32 %v342, %v364
  %v375 = vmul.f32 %v346, %v371
  %v376 = vadd.f32 %v332, %v374
  %v377 = vadd.f32 %v333, %v375
  %v378 = vmul.f32 %v376, %v146
  %v379 = vmul.f32 %v377, %v153
  %v380 = vmax.f32 %v378, 0.0
  %v381 = vmax.f32 %v379, 0.0
  %vm382 = vcmp.eq.s32.totalorder %v80, 5
  %v383 = vlaneseq
  %v384 = vshrl.u32 %v383, 7
  %v385 = vsub.s32 5, %v384
  %v386 = vrot.slane %v380, %v385
  %v387 = vlaneseq
  %v388 = vshrl.u32 %v387, 7
  %v389 = vsub.s32 5, %v388
  %v390 = vrot.slane %v381, %v389
  %393 = vset.pattern.permute.xlu0 0
  %394 = vperm.xlu0 %393, %v386
  %v395 = vpop.permute.xlu0 %394
  %396 = vset.pattern.permute.xlu0 0
  %397 = vperm.xlu0 %396, %v390
  %v398 = vpop.permute.xlu0 %397
  %v399 = vsel %vm90, %v398, %v395
  %v401 = vsel %vm382, %v399, %v357
  %v402 = vlaneseq
  %v403 = vshrl.u32 %v402, 7
  %v404 = vsub.s32 5, %v403
  %v405 = vrot.slane %v28, %v404
  %407 = vbcast.lane.b32.xlu0 %v405, 256
  %v408 = vpop.permute.xlu0 %407
  %v409 = vlaneseq
  %v410 = vshrl.u32 %v409, 7
  %v411 = vsub.s32 5, %v410
  %v412 = vrot.slane %v29, %v411
  %414 = vbcast.lane.b32.xlu0 %v412, 256
  %v415 = vpop.permute.xlu0 %414
  %v418 = vmul.f32 %v386, %v408
  %v419 = vmul.f32 %v390, %v415
  %v420 = vadd.f32 %v376, %v418
  %v421 = vadd.f32 %v377, %v419
  %v422 = vmul.f32 %v420, %v146
  %v423 = vmul.f32 %v421, %v153
  %v424 = vmax.f32 %v422, 0.0
  %v425 = vmax.f32 %v423, 0.0
  %vm426 = vcmp.eq.s32.totalorder %v80, 6
  %v427 = vlaneseq
  %v428 = vshrl.u32 %v427, 7
  %v429 = vsub.s32 6, %v428
  %v430 = vrot.slane %v424, %v429
  %v431 = vlaneseq
  %v432 = vshrl.u32 %v431, 7
  %v433 = vsub.s32 6, %v432
  %v434 = vrot.slane %v425, %v433
  %437 = vset.pattern.permute.xlu0 0
  %438 = vperm.xlu0 %437, %v430
  %v439 = vpop.permute.xlu0 %438
  %440 = vset.pattern.permute.xlu0 0
  %441 = vperm.xlu0 %440, %v434
  %v442 = vpop.permute.xlu0 %441
  %v443 = vsel %vm90, %v442, %v439
  %v445 = vsel %vm426, %v443, %v401
  %v446 = vlaneseq
  %v447 = vshrl.u32 %v446, 7
  %v448 = vsub.s32 6, %v447
  %v449 = vrot.slane %v28, %v448
  %451 = vbcast.lane.b32.xlu0 %v449, 256
  %v452 = vpop.permute.xlu0 %451
  %v453 = vlaneseq
  %v454 = vshrl.u32 %v453, 7
  %v455 = vsub.s32 6, %v454
  %v456 = vrot.slane %v29, %v455
  %458 = vbcast.lane.b32.xlu0 %v456, 256
  %v459 = vpop.permute.xlu0 %458
  %v462 = vmul.f32 %v430, %v452
  %v463 = vmul.f32 %v434, %v459
  %v464 = vadd.f32 %v420, %v462
  %v465 = vadd.f32 %v421, %v463
  %v466 = vmul.f32 %v464, %v146
  %v467 = vmul.f32 %v465, %v153
  %v468 = vmax.f32 %v466, 0.0
  %v469 = vmax.f32 %v467, 0.0
  %vm470 = vcmp.eq.s32.totalorder %v80, 7
  %v471 = vlaneseq
  %v472 = vshrl.u32 %v471, 7
  %v473 = vsub.s32 7, %v472
  %v474 = vrot.slane %v468, %v473
  %v475 = vlaneseq
  %v476 = vshrl.u32 %v475, 7
  %v477 = vsub.s32 7, %v476
  %v478 = vrot.slane %v469, %v477
  %481 = vset.pattern.permute.xlu0 0
  %482 = vperm.xlu0 %481, %v474
  %v483 = vpop.permute.xlu0 %482
  %484 = vset.pattern.permute.xlu0 0
  %485 = vperm.xlu0 %484, %v478
  %v486 = vpop.permute.xlu0 %485
  %v487 = vsel %vm90, %v486, %v483
  %v489 = vsel %vm470, %v487, %v445
  %491 = vrot.lane.b32.xlu0 %v489, 8
  %v492 = vpop.permute.xlu0 %491
  %v494 = vadd.s32 %v80, 4294967280
  %v495 = vlaneseq
  %v496 = vshrl.u32 %v495, 7
  %v497 = vsub.s32 %v494, %v496
  %v498 = vrot.slane %v73, %v497
  %v499 = vlaneseq
  %v500 = vshrl.u32 %v499, 7
  %v501 = vsub.s32 %v494, %v500
  %v502 = vrot.slane %v76, %v501
  %v503 = vsel %vm90, %v502, %v498
  %v505 = vsel %vm93, %v27, %v492
  %vm506 = vcmask 130048
  %v507 = vsel %vm506, %v505, %v503
  %v508 = vld [vmem:[%s6] sm:$0xff]
  %v509 = vld [vmem:[%s6 + $0x8] sm:$0x3f]
  %v510 = vld [vmem:[%s6 + $0x10] sm:$0xff]
  %v511 = vld [vmem:[%s6 + $0x18] sm:$0x3f]
  %v514 = vunpack.c.l.s4 1966171168
  %v515 = vunpack.c.0.s8 %v514
  %v516 = vlaneseq
  %v517 = vshrl.u32 %v516, 7
  %v518 = vsub.s32 %v515, %v517
  %v519 = vrot.slane %v507, %v518
  %v520 = vcombine.high %v519, %v519
  %v522 = vunpack.c.l.s4 1966171168
  %v523 = vunpack.c.0.s8 %v522
  %v524 = vlaneseq
  %v525 = vshrl.u32 %v524, 7
  %v526 = vsub.s32 %v523, %v525
  %v527 = vrot.slane %v519, %v526
  %v529 = vunpack.c.l.s4 1966171168
  %v530 = vunpack.c.0.s8 %v529
  %v531 = vlaneseq
  %v532 = vshrl.u32 %v531, 7
  %v533 = vsub.s32 %v530, %v532
  %v534 = vrot.slane %v520, %v533
  %v535 = vlaneseq
  %v536 = vshrl.u32 %v535, 7
  %v537 = vsub.s32 0, %v536
  %v538 = vrot.slane %v527, %v537
  %v539 = vlaneseq
  %v540 = vshrl.u32 %v539, 7
  %v541 = vsub.s32 0, %v540
  %v542 = vrot.slane %v534, %v541
  %v545 = vmul.f32 %v538, %v508
  %v546 = vmul.f32 %v538, %v509
  %v547 = vmul.f32 %v542, %v510
  %v548 = vmul.f32 %v542, %v511
  %vm549 = vcmask 162816
  %v550 = vsel %vm549, %v545, 0.0
  %551 = vadd.xlane.f32.xlu0 %v550
  %v552 = vpop.xlane.xlu0 %551
  %vm553 = vcmask 160768
  %v554 = vsel %vm553, %v546, 0.0
  %555 = vadd.xlane.f32.xlu0 %v554
  %v556 = vpop.xlane.xlu0 %555
  %v557 = vsel %vm549, %v547, 0.0
  %558 = vadd.xlane.f32.xlu0 %v557
  %v559 = vpop.xlane.xlu0 %558
  %v560 = vsel %vm553, %v548, 0.0
  %561 = vadd.xlane.f32.xlu0 %v560
  %v562 = vpop.xlane.xlu0 %561
  %v567 = vlaneseq
  %v568 = vshrl.u32 %v567, 7
  %v569 = vsub.s32 %v80, %v568
  %v570 = vrot.slane %v552, %v569
  %v571 = vlaneseq
  %v572 = vshrl.u32 %v571, 7
  %v573 = vsub.s32 %v81, %v572
  %v574 = vrot.slane %v556, %v573
  %vm575 = vcmask 130112
  %v576 = vsel %vm575, %v574, %v570
  %v577 = vlaneseq
  %v578 = vshrl.u32 %v577, 7
  %v579 = vsub.s32 %v80, %v578
  %v580 = vrot.slane %v559, %v579
  %v581 = vlaneseq
  %v582 = vshrl.u32 %v581, 7
  %v583 = vsub.s32 %v81, %v582
  %v584 = vrot.slane %v562, %v583
  %v585 = vsel %vm575, %v584, %v580
  %v586 = vsel %vm90, %v585, %v576
  %vm588 = vcmask 107520
  %589 = vst.msk [vmem:[%s7] sm:$0x3] %vm588, %v586
  // Predicated region
  $region30: #{networked_rens_forward.1} parent=0 // pred_check
    _
  $region31: #{networked_rens_forward.1} parent=0 // pred_check_branch
    %591 = sbr.rel (0) target = $region33
  $region32: #{networked_rens_forward.1} parent=0 // pred_region
    _
  $region33: #{networked_rens_forward.1} parent=0 // pred_fallthru
    _
  // Predicated region
  $region34: #{networked_rens_forward.1} parent=0 // pred_check
    _
  $region35: #{networked_rens_forward.1} parent=0 // pred_check_branch
    %593 = sbr.rel (0) target = $region37
  $region36: #{networked_rens_forward.1} parent=0 // pred_region
    _
  $region37: #{networked_rens_forward.1} parent=0 // pred_fallthru
    _

</llo_original>
